<compile_context>
chip_gen: v7x
topology: tpu7x:2x2x1
jax: 0.10.0
libtpu: 0.0.40
codegen_flags: <defaults>
</compile_context>

<pallas_src>
import functools

import jax
import jax.numpy as jnp
from jax import lax
from jax.experimental import pallas as pl
from jax.experimental.pallas import tpu as pltpu


# ----------------------------- Pallas kernel -------------------------------

def _bottleneck_kernel(x_ref, w1_ref, b1_ref, w2_ref, b2_ref, w3_ref, b3_ref,
                       mask_ref, out_ref, *, H, W):
    """One image per grid step; channels on sublanes, H*W on lanes."""
    S = H * W                                                  # lane axis

    x = x_ref[0]                                               # (Cin, S)

    # --- conv1 (1x1) + folded BN1 + ReLU: (P,Cin)@(Cin,S) -> (P,S) ----------
    t1 = jnp.dot(w1_ref[...], x, preferred_element_type=jnp.float32)
    t1 = jnp.maximum(t1 + b1_ref[...], 0.0)                    # (P, S)

    # --- conv2 (3x3, stride=1, pad=1) ---------------------------------------
    # 9 accumulated (P,P)@(P,S) matmuls over lane-rolled (XLU) taps.
    # tap = (oy+1)*3 + (ox+1); tap 4 is the unshifted, always-valid center.
    t2 = jnp.dot(w2_ref[4], t1, preferred_element_type=jnp.float32)
    for oy in (-1, 0, 1):
        for ox in (-1, 0, 1):
            if oy == 0 and ox == 0:
                continue
            tap = (oy + 1) * 3 + (ox + 1)
            off = oy * W + ox
            # rolled[:, p] = t1[:, p + off]; precomputed mask zeroes taps whose
            # source pixel falls outside the image (zero padding).
            rolled = pltpu.roll(t1, shift=(-off) % S, axis=1)
            t2 = t2 + jnp.dot(w2_ref[tap], rolled * mask_ref[tap],
                              preferred_element_type=jnp.float32)
    t2 = jnp.maximum(t2 + b2_ref[...], 0.0)                    # (P, S)

    # --- conv3 (1x1) + folded BN3 + identity residual + final ReLU ----------
    t3 = jnp.dot(w3_ref[...], t2, preferred_element_type=jnp.float32)
    out_ref[0] = jnp.maximum(t3 + b3_ref[...] + x, 0.0)        # (Cout, S)


# ------------------------------- wrapper ------------------------------------

def bottleneck_forward(x_nchw, params):
    """Fused Bottleneck forward. x_nchw: (N, C, H, W) float32 -> NCHW output."""
    w1, s1, b1, w2_hwio, s2, b2, w3, s3, b3 = params
    x = x_nchw.astype(jnp.float32)
    N, Cin, H, W = x.shape
    P = w1.shape[1]
    Cout = w3.shape[1]
    assert Cin == Cout, "identity residual requires inplanes == planes * 4"
    S = H * W

    # Free reshape only (no HBM transpose): (N, Cin, H, W) -> (N, Cin, S).
    x_r = x.reshape(N, Cin, S)

    # Fold the eval-mode BN scale into the conv weights (output-channel axis);
    # only the bias is applied in-kernel. Matmuls are (out,in)@(in,S).
    w1t = (w1 * s1.reshape(1, P)).T                              # (P, Cin)
    w2f = w2_hwio * s2.reshape(1, 1, 1, P)                       # (3,3,P,P) HWIO
    # w2stk[tap, co, ci] = w2f[dy, dx, ci, co] with tap = dy*3 + dx
    w2stk = w2f.reshape(9, P, P).transpose(0, 2, 1)              # (9, P, P)
    w3t = (w3 * s3.reshape(1, Cout)).T                           # (Cout, P)
    b1c = b1.reshape(P, 1)
    b2c = b2.reshape(P, 1)
    b3c = b3.reshape(Cout, 1)

    # Constant border-validity masks, (9, 1, S): mask[tap, 0, p] = 1 iff the
    # source pixel (y+oy, x+ox) lies inside the image for p = y*W + x.
    pidx = jnp.arange(S, dtype=jnp.int32)
    yy = pidx // W
    xx = pidx - yy * W
    masks = []
    for oy in (-1, 0, 1):
        for ox in (-1, 0, 1):
            valid = ((yy + oy) >= 0) & ((yy + oy) < H) & \
                    ((xx + ox) >= 0) & ((xx + ox) < W)
            masks.append(valid)
    mask = jnp.stack(masks, axis=0).astype(jnp.float32).reshape(9, 1, S)

    flops = 2 * N * S * (Cin * P + 9 * P * P + P * Cout)
    bytes_accessed = 4 * (N * S * (Cin + Cout)
                          + P * Cin + 9 * P * P + Cout * P
                          + 2 * P + Cout + 9 * S)

    out_r = pl.pallas_call(
        functools.partial(_bottleneck_kernel, H=H, W=W),
        out_shape=jax.ShapeDtypeStruct((N, Cout, S), jnp.float32),
        grid_spec=pltpu.PrefetchScalarGridSpec(
            num_scalar_prefetch=0,
            grid=(N,),
            in_specs=[
                pl.BlockSpec((1, Cin, S), lambda n: (n, 0, 0)),
                pl.BlockSpec((P, Cin),    lambda n: (0, 0)),
                pl.BlockSpec((P, 1),      lambda n: (0, 0)),
                pl.BlockSpec((9, P, P),   lambda n: (0, 0, 0)),
                pl.BlockSpec((P, 1),      lambda n: (0, 0)),
                pl.BlockSpec((Cout, P),   lambda n: (0, 0)),
                pl.BlockSpec((Cout, 1),   lambda n: (0, 0)),
                pl.BlockSpec((9, 1, S),   lambda n: (0, 0, 0)),
            ],
            out_specs=pl.BlockSpec((1, Cout, S), lambda n: (n, 0, 0)),
        ),
        compiler_params=pltpu.CompilerParams(
            dimension_semantics=("parallel",)),
        cost_estimate=pl.CostEstimate(flops=flops, transcendentals=0,
                                      bytes_accessed=bytes_accessed),
    )(x_r, w1t, b1c, w2stk, b2c, w3t, b3c, mask)

    # Free reshape back to NCHW: (N, Cout, S) -> (N, Cout, H, W).
    return out_r.reshape(N, Cout, H, W)


# ------------------------- parameter initialization -------------------------

def _folded_bn(kg, kb, km, kv, c, eps=1e-5):
    gamma = jax.random.uniform(kg, (c,), jnp.float32, 0.5, 1.5)
    beta = 0.1 * jax.random.normal(kb, (c,), jnp.float32)
    mean = 0.1 * jax.random.normal(km, (c,), jnp.float32)
    var = jax.random.uniform(kv, (c,), jnp.float32, 0.5, 1.5)
    scale = gamma / jnp.sqrt(var + eps)
    bias = beta - mean * scale
    return scale.reshape(1, c), bias.reshape(1, c)


def init_params(key, inplanes, planes):
    expansion = 4
    ks = jax.random.split(key, 15)
    w1 = 0.1 * jax.random.normal(ks[0], (inplanes, planes), jnp.float32)
    w2 = 0.1 * jax.random.normal(ks[1], (3, 3, planes, planes), jnp.float32)  # HWIO
    w3 = 0.1 * jax.random.normal(ks[2], (planes, planes * expansion), jnp.float32)
    s1, b1 = _folded_bn(ks[3], ks[4], ks[5], ks[6], planes)
    s2, b2 = _folded_bn(ks[7], ks[8], ks[9], ks[10], planes)
    s3, b3 = _folded_bn(ks[11], ks[12], ks[13], ks[14], planes * expansion)
    return (w1, s1, b1, w2, s2, b2, w3, s3, b3)


# ----------------------------- pure-JAX reference ---------------------------

def ref_forward(x_nchw, params):
    w1, s1, b1, w2_hwio, s2, b2, w3, s3, b3 = params
    x = jnp.transpose(x_nchw, (0, 2, 3, 1)).astype(jnp.float32)
    dn = ('NHWC', 'HWIO', 'NHWC')

    t = lax.conv_general_dilated(x, w1.reshape(1, 1, *w1.shape), (1, 1),
                                 'VALID', dimension_numbers=dn)
    t = jnp.maximum(t * s1.reshape(1, 1, 1, -1) + b1.reshape(1, 1, 1, -1), 0.0)
    t = lax.conv_general_dilated(t, w2_hwio, (1, 1), 'SAME',
                                 dimension_numbers=dn)
    t = jnp.maximum(t * s2.reshape(1, 1, 1, -1) + b2.reshape(1, 1, 1, -1), 0.0)
    t = lax.conv_general_dilated(t, w3.reshape(1, 1, *w3.shape), (1, 1),
                                 'VALID', dimension_numbers=dn)
    t = t * s3.reshape(1, 1, 1, -1) + b3.reshape(1, 1, 1, -1)
    out = jnp.maximum(t + x, 0.0)
    return jnp.transpose(out, (0, 3, 1, 2))


# ---------------------------------- main -------------------------------------

if __name__ == "__main__":
    key = jax.random.PRNGKey(0)
    k_x, k_p = jax.random.split(key)

    # Bottleneck(inplanes=16, planes=4, stride=1, downsample=None)
    N, inplanes, planes, H, W = 2, 16, 4, 16, 16
    x = jax.random.normal(k_x, (N, inplanes, H, W), jnp.float32)   # NCHW
    params = init_params(k_p, inplanes, planes)

    out = bottleneck_forward(x, params)
    out = jax.block_until_ready(out)

    ref = jax.block_until_ready(ref_forward(x, params))
    assert out.shape == (N, planes * 4, H, W)
    if not jnp.allclose(out, ref, atol=1e-4, rtol=1e-4):
        raise AssertionError("Pallas kernel output mismatch vs reference")

    print("KERNEL_OK")
</pallas_src>

<mosaic_0001>
module attributes {stable_mosaic.version = 11 : i64} {
  func.func @_bottleneck_kernel(%arg0: i32, %arg1: memref<1x16x256xf32, #tpu.memory_space<vmem>>, %arg2: memref<4x16xf32, #tpu.memory_space<vmem>>, %arg3: memref<4x1xf32, #tpu.memory_space<vmem>>, %arg4: memref<9x4x4xf32, #tpu.memory_space<vmem>>, %arg5: memref<4x1xf32, #tpu.memory_space<vmem>>, %arg6: memref<16x4xf32, #tpu.memory_space<vmem>>, %arg7: memref<16x1xf32, #tpu.memory_space<vmem>>, %arg8: memref<9x1x256xf32, #tpu.memory_space<vmem>>, %arg9: memref<1x16x256xf32, #tpu.memory_space<vmem>>) attributes {dimension_semantics = [#tpu.dimension_semantics<parallel>], iteration_bounds = array<i64: 2>, scalar_prefetch = 0 : i64, scratch_operands = 0 : i64, tpu.core_type = #tpu.core_type<tc>, window_params = [{transform_indices = @transform_0, window_bounds = array<i64: 1, 16, 256>}, {pipeline_mode = #tpu.pipeline_mode<synchronous>, transform_indices = @transform_1, window_bounds = array<i64: 4, 16>}, {pipeline_mode = #tpu.pipeline_mode<synchronous>, transform_indices = @transform_2, window_bounds = array<i64: 4, 1>}, {pipeline_mode = #tpu.pipeline_mode<synchronous>, transform_indices = @transform_3, window_bounds = array<i64: 9, 4, 4>}, {pipeline_mode = #tpu.pipeline_mode<synchronous>, transform_indices = @transform_4, window_bounds = array<i64: 4, 1>}, {pipeline_mode = #tpu.pipeline_mode<synchronous>, transform_indices = @transform_5, window_bounds = array<i64: 16, 4>}, {pipeline_mode = #tpu.pipeline_mode<synchronous>, transform_indices = @transform_6, window_bounds = array<i64: 16, 1>}, {pipeline_mode = #tpu.pipeline_mode<synchronous>, transform_indices = @transform_7, window_bounds = array<i64: 9, 1, 256>}, {transform_indices = @transform_8, window_bounds = array<i64: 1, 16, 256>}]} {
    %c0 = arith.constant 0 : index
    %c0_0 = arith.constant 0 : index
    %c0_1 = arith.constant 0 : index
    %0 = vector.load %arg1[%c0, %c0_0, %c0_1] : memref<1x16x256xf32, #tpu.memory_space<vmem>>, vector<1x16x256xf32>
    %1 = vector.shape_cast %0 : vector<1x16x256xf32> to vector<16x256xf32>
    %c0_2 = arith.constant 0 : index
    %c0_3 = arith.constant 0 : index
    %2 = vector.load %arg2[%c0_2, %c0_3] : memref<4x16xf32, #tpu.memory_space<vmem>>, vector<4x16xf32>
    %cst = arith.constant dense<0.000000e+00> : vector<4x256xf32>
    %3 = tpu.matmul %2, %1, %cst {dimension_numbers = #tpu.dot_dimension_numbers<[1], [0], [0], [1], [0, 0, 1, 1], [], []>} : vector<4x16xf32>, vector<16x256xf32>, vector<4x256xf32> -> vector<4x256xf32>
    %c0_4 = arith.constant 0 : index
    %c0_5 = arith.constant 0 : index
    %4 = vector.load %arg3[%c0_4, %c0_5] : memref<4x1xf32, #tpu.memory_space<vmem>>, vector<4x1xf32>
    %5 = vector.broadcast %4 : vector<4x1xf32> to vector<4x256xf32>
    %6 = arith.addf %3, %5 : vector<4x256xf32>
    %cst_6 = arith.constant 0.000000e+00 : f32
    %7 = vector.broadcast %cst_6 : f32 to vector<4x256xf32>
    %8 = arith.maximumf %6, %7 : vector<4x256xf32>
    %c4 = arith.constant 4 : index
    %c0_7 = arith.constant 0 : index
    %c0_8 = arith.constant 0 : index
    %9 = vector.load %arg4[%c4, %c0_7, %c0_8] : memref<9x4x4xf32, #tpu.memory_space<vmem>>, vector<1x4x4xf32>
    %10 = vector.shape_cast %9 : vector<1x4x4xf32> to vector<4x4xf32>
    %cst_9 = arith.constant dense<0.000000e+00> : vector<4x256xf32>
    %11 = tpu.matmul %10, %8, %cst_9 {dimension_numbers = #tpu.dot_dimension_numbers<[1], [0], [0], [1], [0, 0, 1, 1], [], []>} : vector<4x4xf32>, vector<4x256xf32>, vector<4x256xf32> -> vector<4x256xf32>
    %c17_i32 = arith.constant 17 : i32
    %12 = tpu.dynamic_rotate %8 by %c17_i32 dim 1 : vector<4x256xf32>, i32 -> vector<4x256xf32>
    %c0_10 = arith.constant 0 : index
    %c0_11 = arith.constant 0 : index
    %c0_12 = arith.constant 0 : index
    %13 = vector.load %arg4[%c0_10, %c0_11, %c0_12] : memref<9x4x4xf32, #tpu.memory_space<vmem>>, vector<1x4x4xf32>
    %14 = vector.shape_cast %13 : vector<1x4x4xf32> to vector<4x4xf32>
    %c0_13 = arith.constant 0 : index
    %c0_14 = arith.constant 0 : index
    %c0_15 = arith.constant 0 : index
    %15 = vector.load %arg8[%c0_13, %c0_14, %c0_15] : memref<9x1x256xf32, #tpu.memory_space<vmem>>, vector<1x1x256xf32>
    %16 = vector.shape_cast %15 : vector<1x1x256xf32> to vector<1x256xf32>
    %17 = vector.broadcast %16 : vector<1x256xf32> to vector<4x256xf32>
    %18 = arith.mulf %12, %17 : vector<4x256xf32>
    %cst_16 = arith.constant dense<0.000000e+00> : vector<4x256xf32>
    %19 = tpu.matmul %14, %18, %cst_16 {dimension_numbers = #tpu.dot_dimension_numbers<[1], [0], [0], [1], [0, 0, 1, 1], [], []>} : vector<4x4xf32>, vector<4x256xf32>, vector<4x256xf32> -> vector<4x256xf32>
    %20 = arith.addf %11, %19 : vector<4x256xf32>
    %c16_i32 = arith.constant 16 : i32
    %21 = tpu.dynamic_rotate %8 by %c16_i32 dim 1 : vector<4x256xf32>, i32 -> vector<4x256xf32>
    %c1 = arith.constant 1 : index
    %c0_17 = arith.constant 0 : index
    %c0_18 = arith.constant 0 : index
    %22 = vector.load %arg4[%c1, %c0_17, %c0_18] : memref<9x4x4xf32, #tpu.memory_space<vmem>>, vector<1x4x4xf32>
    %23 = vector.shape_cast %22 : vector<1x4x4xf32> to vector<4x4xf32>
    %c1_19 = arith.constant 1 : index
    %c0_20 = arith.constant 0 : index
    %c0_21 = arith.constant 0 : index
    %24 = vector.load %arg8[%c1_19, %c0_20, %c0_21] : memref<9x1x256xf32, #tpu.memory_space<vmem>>, vector<1x1x256xf32>
    %25 = vector.shape_cast %24 : vector<1x1x256xf32> to vector<1x256xf32>
    %26 = vector.broadcast %25 : vector<1x256xf32> to vector<4x256xf32>
    %27 = arith.mulf %21, %26 : vector<4x256xf32>
    %cst_22 = arith.constant dense<0.000000e+00> : vector<4x256xf32>
    %28 = tpu.matmul %23, %27, %cst_22 {dimension_numbers = #tpu.dot_dimension_numbers<[1], [0], [0], [1], [0, 0, 1, 1], [], []>} : vector<4x4xf32>, vector<4x256xf32>, vector<4x256xf32> -> vector<4x256xf32>
    %29 = arith.addf %20, %28 : vector<4x256xf32>
    %c15_i32 = arith.constant 15 : i32
    %30 = tpu.dynamic_rotate %8 by %c15_i32 dim 1 : vector<4x256xf32>, i32 -> vector<4x256xf32>
    %c2 = arith.constant 2 : index
    %c0_23 = arith.constant 0 : index
    %c0_24 = arith.constant 0 : index
    %31 = vector.load %arg4[%c2, %c0_23, %c0_24] : memref<9x4x4xf32, #tpu.memory_space<vmem>>, vector<1x4x4xf32>
    %32 = vector.shape_cast %31 : vector<1x4x4xf32> to vector<4x4xf32>
    %c2_25 = arith.constant 2 : index
    %c0_26 = arith.constant 0 : index
    %c0_27 = arith.constant 0 : index
    %33 = vector.load %arg8[%c2_25, %c0_26, %c0_27] : memref<9x1x256xf32, #tpu.memory_space<vmem>>, vector<1x1x256xf32>
    %34 = vector.shape_cast %33 : vector<1x1x256xf32> to vector<1x256xf32>
    %35 = vector.broadcast %34 : vector<1x256xf32> to vector<4x256xf32>
    %36 = arith.mulf %30, %35 : vector<4x256xf32>
    %cst_28 = arith.constant dense<0.000000e+00> : vector<4x256xf32>
    %37 = tpu.matmul %32, %36, %cst_28 {dimension_numbers = #tpu.dot_dimension_numbers<[1], [0], [0], [1], [0, 0, 1, 1], [], []>} : vector<4x4xf32>, vector<4x256xf32>, vector<4x256xf32> -> vector<4x256xf32>
    %38 = arith.addf %29, %37 : vector<4x256xf32>
    %c1_i32 = arith.constant 1 : i32
    %39 = tpu.dynamic_rotate %8 by %c1_i32 dim 1 : vector<4x256xf32>, i32 -> vector<4x256xf32>
    %c3 = arith.constant 3 : index
    %c0_29 = arith.constant 0 : index
    %c0_30 = arith.constant 0 : index
    %40 = vector.load %arg4[%c3, %c0_29, %c0_30] : memref<9x4x4xf32, #tpu.memory_space<vmem>>, vector<1x4x4xf32>
    %41 = vector.shape_cast %40 : vector<1x4x4xf32> to vector<4x4xf32>
    %c3_31 = arith.constant 3 : index
    %c0_32 = arith.constant 0 : index
    %c0_33 = arith.constant 0 : index
    %42 = vector.load %arg8[%c3_31, %c0_32, %c0_33] : memref<9x1x256xf32, #tpu.memory_space<vmem>>, vector<1x1x256xf32>
    %43 = vector.shape_cast %42 : vector<1x1x256xf32> to vector<1x256xf32>
    %44 = vector.broadcast %43 : vector<1x256xf32> to vector<4x256xf32>
    %45 = arith.mulf %39, %44 : vector<4x256xf32>
    %cst_34 = arith.constant dense<0.000000e+00> : vector<4x256xf32>
    %46 = tpu.matmul %41, %45, %cst_34 {dimension_numbers = #tpu.dot_dimension_numbers<[1], [0], [0], [1], [0, 0, 1, 1], [], []>} : vector<4x4xf32>, vector<4x256xf32>, vector<4x256xf32> -> vector<4x256xf32>
    %47 = arith.addf %38, %46 : vector<4x256xf32>
    %c255_i32 = arith.constant 255 : i32
    %48 = tpu.dynamic_rotate %8 by %c255_i32 dim 1 : vector<4x256xf32>, i32 -> vector<4x256xf32>
    %c5 = arith.constant 5 : index
    %c0_35 = arith.constant 0 : index
    %c0_36 = arith.constant 0 : index
    %49 = vector.load %arg4[%c5, %c0_35, %c0_36] : memref<9x4x4xf32, #tpu.memory_space<vmem>>, vector<1x4x4xf32>
    %50 = vector.shape_cast %49 : vector<1x4x4xf32> to vector<4x4xf32>
    %c5_37 = arith.constant 5 : index
    %c0_38 = arith.constant 0 : index
    %c0_39 = arith.constant 0 : index
    %51 = vector.load %arg8[%c5_37, %c0_38, %c0_39] : memref<9x1x256xf32, #tpu.memory_space<vmem>>, vector<1x1x256xf32>
    %52 = vector.shape_cast %51 : vector<1x1x256xf32> to vector<1x256xf32>
    %53 = vector.broadcast %52 : vector<1x256xf32> to vector<4x256xf32>
    %54 = arith.mulf %48, %53 : vector<4x256xf32>
    %cst_40 = arith.constant dense<0.000000e+00> : vector<4x256xf32>
    %55 = tpu.matmul %50, %54, %cst_40 {dimension_numbers = #tpu.dot_dimension_numbers<[1], [0], [0], [1], [0, 0, 1, 1], [], []>} : vector<4x4xf32>, vector<4x256xf32>, vector<4x256xf32> -> vector<4x256xf32>
    %56 = arith.addf %47, %55 : vector<4x256xf32>
    %c241_i32 = arith.constant 241 : i32
    %57 = tpu.dynamic_rotate %8 by %c241_i32 dim 1 : vector<4x256xf32>, i32 -> vector<4x256xf32>
    %c6 = arith.constant 6 : index
    %c0_41 = arith.constant 0 : index
    %c0_42 = arith.constant 0 : index
    %58 = vector.load %arg4[%c6, %c0_41, %c0_42] : memref<9x4x4xf32, #tpu.memory_space<vmem>>, vector<1x4x4xf32>
    %59 = vector.shape_cast %58 : vector<1x4x4xf32> to vector<4x4xf32>
    %c6_43 = arith.constant 6 : index
    %c0_44 = arith.constant 0 : index
    %c0_45 = arith.constant 0 : index
    %60 = vector.load %arg8[%c6_43, %c0_44, %c0_45] : memref<9x1x256xf32, #tpu.memory_space<vmem>>, vector<1x1x256xf32>
    %61 = vector.shape_cast %60 : vector<1x1x256xf32> to vector<1x256xf32>
    %62 = vector.broadcast %61 : vector<1x256xf32> to vector<4x256xf32>
    %63 = arith.mulf %57, %62 : vector<4x256xf32>
    %cst_46 = arith.constant dense<0.000000e+00> : vector<4x256xf32>
    %64 = tpu.matmul %59, %63, %cst_46 {dimension_numbers = #tpu.dot_dimension_numbers<[1], [0], [0], [1], [0, 0, 1, 1], [], []>} : vector<4x4xf32>, vector<4x256xf32>, vector<4x256xf32> -> vector<4x256xf32>
    %65 = arith.addf %56, %64 : vector<4x256xf32>
    %c240_i32 = arith.constant 240 : i32
    %66 = tpu.dynamic_rotate %8 by %c240_i32 dim 1 : vector<4x256xf32>, i32 -> vector<4x256xf32>
    %c7 = arith.constant 7 : index
    %c0_47 = arith.constant 0 : index
    %c0_48 = arith.constant 0 : index
    %67 = vector.load %arg4[%c7, %c0_47, %c0_48] : memref<9x4x4xf32, #tpu.memory_space<vmem>>, vector<1x4x4xf32>
    %68 = vector.shape_cast %67 : vector<1x4x4xf32> to vector<4x4xf32>
    %c7_49 = arith.constant 7 : index
    %c0_50 = arith.constant 0 : index
    %c0_51 = arith.constant 0 : index
    %69 = vector.load %arg8[%c7_49, %c0_50, %c0_51] : memref<9x1x256xf32, #tpu.memory_space<vmem>>, vector<1x1x256xf32>
    %70 = vector.shape_cast %69 : vector<1x1x256xf32> to vector<1x256xf32>
    %71 = vector.broadcast %70 : vector<1x256xf32> to vector<4x256xf32>
    %72 = arith.mulf %66, %71 : vector<4x256xf32>
    %cst_52 = arith.constant dense<0.000000e+00> : vector<4x256xf32>
    %73 = tpu.matmul %68, %72, %cst_52 {dimension_numbers = #tpu.dot_dimension_numbers<[1], [0], [0], [1], [0, 0, 1, 1], [], []>} : vector<4x4xf32>, vector<4x256xf32>, vector<4x256xf32> -> vector<4x256xf32>
    %74 = arith.addf %65, %73 : vector<4x256xf32>
    %c239_i32 = arith.constant 239 : i32
    %75 = tpu.dynamic_rotate %8 by %c239_i32 dim 1 : vector<4x256xf32>, i32 -> vector<4x256xf32>
    %c8 = arith.constant 8 : index
    %c0_53 = arith.constant 0 : index
    %c0_54 = arith.constant 0 : index
    %76 = vector.load %arg4[%c8, %c0_53, %c0_54] : memref<9x4x4xf32, #tpu.memory_space<vmem>>, vector<1x4x4xf32>
    %77 = vector.shape_cast %76 : vector<1x4x4xf32> to vector<4x4xf32>
    %c8_55 = arith.constant 8 : index
    %c0_56 = arith.constant 0 : index
    %c0_57 = arith.constant 0 : index
    %78 = vector.load %arg8[%c8_55, %c0_56, %c0_57] : memref<9x1x256xf32, #tpu.memory_space<vmem>>, vector<1x1x256xf32>
    %79 = vector.shape_cast %78 : vector<1x1x256xf32> to vector<1x256xf32>
    %80 = vector.broadcast %79 : vector<1x256xf32> to vector<4x256xf32>
    %81 = arith.mulf %75, %80 : vector<4x256xf32>
    %cst_58 = arith.constant dense<0.000000e+00> : vector<4x256xf32>
    %82 = tpu.matmul %77, %81, %cst_58 {dimension_numbers = #tpu.dot_dimension_numbers<[1], [0], [0], [1], [0, 0, 1, 1], [], []>} : vector<4x4xf32>, vector<4x256xf32>, vector<4x256xf32> -> vector<4x256xf32>
    %83 = arith.addf %74, %82 : vector<4x256xf32>
    %c0_59 = arith.constant 0 : index
    %c0_60 = arith.constant 0 : index
    %84 = vector.load %arg5[%c0_59, %c0_60] : memref<4x1xf32, #tpu.memory_space<vmem>>, vector<4x1xf32>
    %85 = vector.broadcast %84 : vector<4x1xf32> to vector<4x256xf32>
    %86 = arith.addf %83, %85 : vector<4x256xf32>
    %cst_61 = arith.constant 0.000000e+00 : f32
    %87 = vector.broadcast %cst_61 : f32 to vector<4x256xf32>
    %88 = arith.maximumf %86, %87 : vector<4x256xf32>
    %c0_62 = arith.constant 0 : index
    %c0_63 = arith.constant 0 : index
    %89 = vector.load %arg6[%c0_62, %c0_63] : memref<16x4xf32, #tpu.memory_space<vmem>>, vector<16x4xf32>
    %cst_64 = arith.constant dense<0.000000e+00> : vector<16x256xf32>
    %90 = tpu.matmul %89, %88, %cst_64 {dimension_numbers = #tpu.dot_dimension_numbers<[1], [0], [0], [1], [0, 0, 1, 1], [], []>} : vector<16x4xf32>, vector<4x256xf32>, vector<16x256xf32> -> vector<16x256xf32>
    %c0_65 = arith.constant 0 : index
    %c0_66 = arith.constant 0 : index
    %91 = vector.load %arg7[%c0_65, %c0_66] : memref<16x1xf32, #tpu.memory_space<vmem>>, vector<16x1xf32>
    %92 = vector.broadcast %91 : vector<16x1xf32> to vector<16x256xf32>
    %93 = arith.addf %90, %92 : vector<16x256xf32>
    %94 = arith.addf %93, %1 : vector<16x256xf32>
    %cst_67 = arith.constant 0.000000e+00 : f32
    %95 = vector.broadcast %cst_67 : f32 to vector<16x256xf32>
    %96 = arith.maximumf %94, %95 : vector<16x256xf32>
    %c0_68 = arith.constant 0 : index
    %c0_69 = arith.constant 0 : index
    %c0_70 = arith.constant 0 : index
    %97 = vector.load %arg9[%c0_68, %c0_69, %c0_70] : memref<1x16x256xf32, #tpu.memory_space<vmem>>, vector<1x16x256xf32>
    %98 = vector.shape_cast %97 : vector<1x16x256xf32> to vector<16x256xf32>
    %99 = vector.shape_cast %96 : vector<16x256xf32> to vector<1x16x256xf32>
    tpu.vector_store %arg9[%c0_68, %c0_69, %c0_70], %99 {strides = array<i32>} : memref<1x16x256xf32, #tpu.memory_space<vmem>>, vector<1x16x256xf32>,
    return
  }
  func.func @transform_0(%arg0: i32) -> (i32, i32, i32) {
    %c0_i32 = arith.constant 0 : i32
    %c0_i32_0 = arith.constant 0 : i32
    %c0_i32_1 = arith.constant 0 : i32
    return %arg0, %c0_i32, %c0_i32_0 : i32, i32, i32
  }
  func.func @transform_1(%arg0: i32) -> (i32, i32) {
    %c0_i32 = arith.constant 0 : i32
    %c0_i32_0 = arith.constant 0 : i32
    %c0_i32_1 = arith.constant 0 : i32
    return %c0_i32, %c0_i32_0 : i32, i32
  }
  func.func @transform_2(%arg0: i32) -> (i32, i32) {
    %c0_i32 = arith.constant 0 : i32
    %c0_i32_0 = arith.constant 0 : i32
    %c0_i32_1 = arith.constant 0 : i32
    return %c0_i32, %c0_i32_0 : i32, i32
  }
  func.func @transform_3(%arg0: i32) -> (i32, i32, i32) {
    %c0_i32 = arith.constant 0 : i32
    %c0_i32_0 = arith.constant 0 : i32
    %c0_i32_1 = arith.constant 0 : i32
    %c0_i32_2 = arith.constant 0 : i32
    return %c0_i32, %c0_i32_0, %c0_i32_1 : i32, i32, i32
  }
  func.func @transform_4(%arg0: i32) -> (i32, i32) {
    %c0_i32 = arith.constant 0 : i32
    %c0_i32_0 = arith.constant 0 : i32
    %c0_i32_1 = arith.constant 0 : i32
    return %c0_i32, %c0_i32_0 : i32, i32
  }
  func.func @transform_5(%arg0: i32) -> (i32, i32) {
    %c0_i32 = arith.constant 0 : i32
    %c0_i32_0 = arith.constant 0 : i32
    %c0_i32_1 = arith.constant 0 : i32
    return %c0_i32, %c0_i32_0 : i32, i32
  }
  func.func @transform_6(%arg0: i32) -> (i32, i32) {
    %c0_i32 = arith.constant 0 : i32
    %c0_i32_0 = arith.constant 0 : i32
    %c0_i32_1 = arith.constant 0 : i32
    return %c0_i32, %c0_i32_0 : i32, i32
  }
  func.func @transform_7(%arg0: i32) -> (i32, i32, i32) {
    %c0_i32 = arith.constant 0 : i32
    %c0_i32_0 = arith.constant 0 : i32
    %c0_i32_1 = arith.constant 0 : i32
    %c0_i32_2 = arith.constant 0 : i32
    return %c0_i32, %c0_i32_0, %c0_i32_1 : i32, i32, i32
  }
  func.func @transform_8(%arg0: i32) -> (i32, i32, i32) {
    %c0_i32 = arith.constant 0 : i32
    %c0_i32_0 = arith.constant 0 : i32
    %c0_i32_1 = arith.constant 0 : i32
    return %arg0, %c0_i32, %c0_i32_0 : i32, i32, i32
  }
}

</mosaic_0001>

<llo_original>
// kernel: tpu_custom_call.1
$region0: #{tpu_custom_call.1}
  #allocation0 [shape = 'u32[]', space=smem, size = 0x4, offset = 0x4, fixed_abs, tag = 'smem constant byte address 0x4 - core index']
  #allocation1 [shape = 'u32[144,128]{1,0:T(1,128)}', space=vmem, size = 0x12000, scoped, tag = 'internal scratch']
  %s0 = inlined_call_operand.vmem [shape: f32[2,16,256], index: 0, kind: input, shape index: {}]
  %s1 = inlined_call_operand.vmem [shape: f32[4,16], index: 1, kind: input, shape index: {}]
  %s2 = inlined_call_operand.vmem [shape: f32[4,1], index: 2, kind: input, shape index: {}]
  %s3 = inlined_call_operand.vmem [shape: f32[9,4,4], index: 3, kind: input, shape index: {}]
  %s4 = inlined_call_operand.vmem [shape: f32[4,1], index: 4, kind: input, shape index: {}]
  %s5 = inlined_call_operand.vmem [shape: f32[16,4], index: 5, kind: input, shape index: {}]
  %s6 = inlined_call_operand.vmem [shape: f32[16,1], index: 6, kind: input, shape index: {}]
  %s7 = inlined_call_operand.vmem [shape: f32[9,1,256], index: 7, kind: input, shape index: {}]
  %s8 = inlined_call_operand.hbm [shape: f32[2,16,256], index: 8, kind: output, shape index: {}]
  %s9 = sld [smem:[#allocation0]]
  $region65: #{tpu_custom_call.1} parent=0
    _
  %s11 = ssub.s32 1, %s9
  %s12 = scalar_select 0, %s11, %s9
  $region1: #{tpu_custom_call.1} parent=0
    #allocation2 [shape = 'u8[32768]{0}', space=vmem, size = 0x8000, scoped, tag = 'output window, operand 0']
    #allocation3 [shape = 's32[2]{0}', space=sflag, size = 0x8, scoped, tag = 'scoped memory for tpu_custom_call.1']
    %13 = vsyncpa [#allocation3], 0
    %s14 = scalar_lea.sflag [#allocation3], 1
    %15 = vsyncpa %s14, 0
    loop: start=0, step=1, limit=4
    $region2: #{tpu_custom_call.1} parent=1 // loop_pre_header
      _
    $region3: #{tpu_custom_call.1} parent=1 // loop_header
      %s17 = sphi 0, %s21
      %p18 = scmp.ge.s32.totalorder %s17, 4
      %s27 = sphi 0, %s29
      %s30 = sphi 0, %s27
      %s31 = sphi 0, %s30
      %s47 = sphi 0, %s31
      %s51 = sphi 0, %s51
      %s53 = sphi 0, %s51
      %s54 = sphi 0, %s53
      %s68 = sphi 0, %s54
      %s72 = sphi 0, %s72
      %s74 = sphi 0, %s72
      %s75 = sphi 0, %s74
      %s89 = sphi 0, %s75
      %s93 = sphi 0, %s93
      %s95 = sphi 0, %s93
      %s96 = sphi 0, %s95
      %s110 = sphi 0, %s96
      %s114 = sphi 0, %s114
      %s116 = sphi 0, %s114
      %s117 = sphi 0, %s116
      %s131 = sphi 0, %s117
      %s135 = sphi 0, %s135
      %s137 = sphi 0, %s135
      %s138 = sphi 0, %s137
      %s152 = sphi 0, %s138
      %s156 = sphi 0, %s156
      %s158 = sphi 0, %s156
      %s159 = sphi 0, %s158
      %s173 = sphi 0, %s159
      %s177 = sphi 0, %s177
      %s179 = sphi 0, %s177
      %s180 = sphi 0, %s179
      %s194 = sphi 0, %s180
      %s200 = sphi 0, %s202
      %s203 = sphi 0, %s200
      %s204 = sphi 0, %s203
      %s220 = sphi 0, %s204
    $region4: #{tpu_custom_call.1} parent=1 // loop_header_branch
      %20 = sbr.rel (%p18) target = $region8
    $region5: #{tpu_custom_call.1} parent=1 // loop_body
      %s22 = ssub.s32 %s17, 1
      %s23 = ssub.s32 %s17, 2
      %s24 = sadd.s32 %s17, 1
      %s25 = ssub.s32 %s17, %s24
      %p26 = scmp.eq.s32.totalorder %s25, 0
      %s28 = sadd.s32 %s27, 1
      %s29 = scalar_select %p26, %s27, %s28
      %p32 = pneg %p26
      %p33 = scmp.eq.s32.totalorder %s17, 1
      %p34 = por %p32, %p33
      %p35 = scmp.ne.s32.totalorder %s27, %s30
      %p36 = scmp.eq.s32.totalorder %s17, 0
      %p37 = por %p35, %p36
      %p38 = scmp.ne.s32.totalorder %s27, %s30
      %p39 = scmp.eq.s32.totalorder %s22, 1
      %p40 = por %p38, %p39
      %p41 = scmp.ne.s32.totalorder %s30, %s31
      %p42 = scmp.eq.s32.totalorder %s22, 0
      %p43 = por %p41, %p42
      %p44 = scmp.ne.s32.totalorder %s30, %s31
      %p45 = scmp.eq.s32.totalorder %s23, 1
      %p46 = por %p44, %p45
      %p48 = scmp.ne.s32.totalorder %s31, %s47
      %p49 = scmp.eq.s32.totalorder %s23, 0
      %p50 = por %p48, %p49
      %s52 = sadd.s32 %s51, 1
      %p55 = scmp.eq.s32.totalorder %s17, 1
      %p56 = scmp.ne.s32.totalorder %s51, %s53
      %p57 = scmp.eq.s32.totalorder %s17, 0
      %p58 = por %p56, %p57
      %p59 = scmp.ne.s32.totalorder %s51, %s53
      %p60 = scmp.eq.s32.totalorder %s22, 1
      %p61 = por %p59, %p60
      %p62 = scmp.ne.s32.totalorder %s53, %s54
      %p63 = scmp.eq.s32.totalorder %s22, 0
      %p64 = por %p62, %p63
      %p65 = scmp.ne.s32.totalorder %s53, %s54
      %p66 = scmp.eq.s32.totalorder %s23, 1
      %p67 = por %p65, %p66
      %p69 = scmp.ne.s32.totalorder %s54, %s68
      %p70 = scmp.eq.s32.totalorder %s23, 0
      %p71 = por %p69, %p70
      %s73 = sadd.s32 %s72, 1
      %p76 = scmp.eq.s32.totalorder %s17, 1
      %p77 = scmp.ne.s32.totalorder %s72, %s74
      %p78 = scmp.eq.s32.totalorder %s17, 0
      %p79 = por %p77, %p78
      %p80 = scmp.ne.s32.totalorder %s72, %s74
      %p81 = scmp.eq.s32.totalorder %s22, 1
      %p82 = por %p80, %p81
      %p83 = scmp.ne.s32.totalorder %s74, %s75
      %p84 = scmp.eq.s32.totalorder %s22, 0
      %p85 = por %p83, %p84
      %p86 = scmp.ne.s32.totalorder %s74, %s75
      %p87 = scmp.eq.s32.totalorder %s23, 1
      %p88 = por %p86, %p87
      %p90 = scmp.ne.s32.totalorder %s75, %s89
      %p91 = scmp.eq.s32.totalorder %s23, 0
      %p92 = por %p90, %p91
      %s94 = sadd.s32 %s93, 1
      %p97 = scmp.eq.s32.totalorder %s17, 1
      %p98 = scmp.ne.s32.totalorder %s93, %s95
      %p99 = scmp.eq.s32.totalorder %s17, 0
      %p100 = por %p98, %p99
      %p101 = scmp.ne.s32.totalorder %s93, %s95
      %p102 = scmp.eq.s32.totalorder %s22, 1
      %p103 = por %p101, %p102
      %p104 = scmp.ne.s32.totalorder %s95, %s96
      %p105 = scmp.eq.s32.totalorder %s22, 0
      %p106 = por %p104, %p105
      %p107 = scmp.ne.s32.totalorder %s95, %s96
      %p108 = scmp.eq.s32.totalorder %s23, 1
      %p109 = por %p107, %p108
      %p111 = scmp.ne.s32.totalorder %s96, %s110
      %p112 = scmp.eq.s32.totalorder %s23, 0
      %p113 = por %p111, %p112
      %s115 = sadd.s32 %s114, 1
      %p118 = scmp.eq.s32.totalorder %s17, 1
      %p119 = scmp.ne.s32.totalorder %s114, %s116
      %p120 = scmp.eq.s32.totalorder %s17, 0
      %p121 = por %p119, %p120
      %p122 = scmp.ne.s32.totalorder %s114, %s116
      %p123 = scmp.eq.s32.totalorder %s22, 1
      %p124 = por %p122, %p123
      %p125 = scmp.ne.s32.totalorder %s116, %s117
      %p126 = scmp.eq.s32.totalorder %s22, 0
      %p127 = por %p125, %p126
      %p128 = scmp.ne.s32.totalorder %s116, %s117
      %p129 = scmp.eq.s32.totalorder %s23, 1
      %p130 = por %p128, %p129
      %p132 = scmp.ne.s32.totalorder %s117, %s131
      %p133 = scmp.eq.s32.totalorder %s23, 0
      %p134 = por %p132, %p133
      %s136 = sadd.s32 %s135, 1
      %p139 = scmp.eq.s32.totalorder %s17, 1
      %p140 = scmp.ne.s32.totalorder %s135, %s137
      %p141 = scmp.eq.s32.totalorder %s17, 0
      %p142 = por %p140, %p141
      %p143 = scmp.ne.s32.totalorder %s135, %s137
      %p144 = scmp.eq.s32.totalorder %s22, 1
      %p145 = por %p143, %p144
      %p146 = scmp.ne.s32.totalorder %s137, %s138
      %p147 = scmp.eq.s32.totalorder %s22, 0
      %p148 = por %p146, %p147
      %p149 = scmp.ne.s32.totalorder %s137, %s138
      %p150 = scmp.eq.s32.totalorder %s23, 1
      %p151 = por %p149, %p150
      %p153 = scmp.ne.s32.totalorder %s138, %s152
      %p154 = scmp.eq.s32.totalorder %s23, 0
      %p155 = por %p153, %p154
      %s157 = sadd.s32 %s156, 1
      %p160 = scmp.eq.s32.totalorder %s17, 1
      %p161 = scmp.ne.s32.totalorder %s156, %s158
      %p162 = scmp.eq.s32.totalorder %s17, 0
      %p163 = por %p161, %p162
      %p164 = scmp.ne.s32.totalorder %s156, %s158
      %p165 = scmp.eq.s32.totalorder %s22, 1
      %p166 = por %p164, %p165
      %p167 = scmp.ne.s32.totalorder %s158, %s159
      %p168 = scmp.eq.s32.totalorder %s22, 0
      %p169 = por %p167, %p168
      %p170 = scmp.ne.s32.totalorder %s158, %s159
      %p171 = scmp.eq.s32.totalorder %s23, 1
      %p172 = por %p170, %p171
      %p174 = scmp.ne.s32.totalorder %s159, %s173
      %p175 = scmp.eq.s32.totalorder %s23, 0
      %p176 = por %p174, %p175
      %s178 = sadd.s32 %s177, 1
      %p181 = scmp.eq.s32.totalorder %s17, 1
      %p182 = scmp.ne.s32.totalorder %s177, %s179
      %p183 = scmp.eq.s32.totalorder %s17, 0
      %p184 = por %p182, %p183
      %p185 = scmp.ne.s32.totalorder %s177, %s179
      %p186 = scmp.eq.s32.totalorder %s22, 1
      %p187 = por %p185, %p186
      %p188 = scmp.ne.s32.totalorder %s179, %s180
      %p189 = scmp.eq.s32.totalorder %s22, 0
      %p190 = por %p188, %p189
      %p191 = scmp.ne.s32.totalorder %s179, %s180
      %p192 = scmp.eq.s32.totalorder %s23, 1
      %p193 = por %p191, %p192
      %p195 = scmp.ne.s32.totalorder %s180, %s194
      %p196 = scmp.eq.s32.totalorder %s23, 0
      %p197 = por %p195, %p196
      %s198 = ssub.s32 %s17, %s24
      %p199 = scmp.eq.s32.totalorder %s198, 0
      %s201 = sadd.s32 %s200, 1
      %s202 = scalar_select %p199, %s200, %s201
      %p205 = pneg %p199
      %p206 = scmp.eq.s32.totalorder %s17, 1
      %p207 = por %p205, %p206
      %p208 = scmp.ne.s32.totalorder %s200, %s203
      %p209 = scmp.eq.s32.totalorder %s17, 0
      %p210 = por %p208, %p209
      %p211 = scmp.ne.s32.totalorder %s200, %s203
      %p212 = scmp.eq.s32.totalorder %s22, 1
      %p213 = por %p211, %p212
      %p214 = scmp.ne.s32.totalorder %s203, %s204
      %p215 = scmp.eq.s32.totalorder %s22, 0
      %p216 = por %p214, %p215
      %p217 = scmp.ne.s32.totalorder %s203, %s204
      %p218 = scmp.eq.s32.totalorder %s23, 1
      %p219 = por %p217, %p218
      %p221 = scmp.ne.s32.totalorder %s204, %s220
      %p222 = scmp.eq.s32.totalorder %s23, 0
      %p223 = por %p221, %p222
      %p224 = scmp.le.s32.totalorder 1, %s17
      %p225 = scmp.lt.s32.totalorder %s17, 3
      %p226 = pnand %p224, %p225
      %p227 = pneg %p226
      // Predicated region
      $region9: #{tpu_custom_call.1} parent=5 // pred_check
        _
      $region10: #{tpu_custom_call.1} parent=5 // pred_check_branch
        %229 = sbr.rel (%p226) target = $region12
      $region11: #{tpu_custom_call.1} parent=5 // pred_region
        %s230 = ssub.s32 %s17, 1
        // Predicated region
        $region13: #{tpu_custom_call.1} parent=11 // pred_check
          %p231 = pneg %p64
        $region14: #{tpu_custom_call.1} parent=11 // pred_check_branch
          %233 = sbr.rel (%p231) target = $region16
        $region15: #{tpu_custom_call.1} parent=11 // pred_region
          _
        $region16: #{tpu_custom_call.1} parent=11 // pred_fallthru
          _
        // Predicated region
        $region17: #{tpu_custom_call.1} parent=11 // pred_check
          %p234 = pneg %p85
        $region18: #{tpu_custom_call.1} parent=11 // pred_check_branch
          %236 = sbr.rel (%p234) target = $region20
        $region19: #{tpu_custom_call.1} parent=11 // pred_region
          _
        $region20: #{tpu_custom_call.1} parent=11 // pred_fallthru
          _
        // Predicated region
        $region21: #{tpu_custom_call.1} parent=11 // pred_check
          %p237 = pneg %p106
        $region22: #{tpu_custom_call.1} parent=11 // pred_check_branch
          %239 = sbr.rel (%p237) target = $region24
        $region23: #{tpu_custom_call.1} parent=11 // pred_region
          _
        $region24: #{tpu_custom_call.1} parent=11 // pred_fallthru
          _
        // Predicated region
        $region25: #{tpu_custom_call.1} parent=11 // pred_check
          %p240 = pneg %p127
        $region26: #{tpu_custom_call.1} parent=11 // pred_check_branch
          %242 = sbr.rel (%p240) target = $region28
        $region27: #{tpu_custom_call.1} parent=11 // pred_region
          _
        $region28: #{tpu_custom_call.1} parent=11 // pred_fallthru
          _
        // Predicated region
        $region29: #{tpu_custom_call.1} parent=11 // pred_check
          %p243 = pneg %p148
        $region30: #{tpu_custom_call.1} parent=11 // pred_check_branch
          %245 = sbr.rel (%p243) target = $region32
        $region31: #{tpu_custom_call.1} parent=11 // pred_region
          _
        $region32: #{tpu_custom_call.1} parent=11 // pred_fallthru
          _
        // Predicated region
        $region33: #{tpu_custom_call.1} parent=11 // pred_check
          %p246 = pneg %p169
        $region34: #{tpu_custom_call.1} parent=11 // pred_check_branch
          %248 = sbr.rel (%p246) target = $region36
        $region35: #{tpu_custom_call.1} parent=11 // pred_region
          _
        $region36: #{tpu_custom_call.1} parent=11 // pred_fallthru
          _
        // Predicated region
        $region37: #{tpu_custom_call.1} parent=11 // pred_check
          %p249 = pneg %p190
        $region38: #{tpu_custom_call.1} parent=11 // pred_check_branch
          %251 = sbr.rel (%p249) target = $region40
        $region39: #{tpu_custom_call.1} parent=11 // pred_region
          _
        $region40: #{tpu_custom_call.1} parent=11 // pred_fallthru
          _
      $region12: #{tpu_custom_call.1} parent=5 // pred_fallthru
        _
      %p252 = scmp.lt.s32.totalorder %s17, 2
      // Predicated region
      $region41: #{tpu_custom_call.1} parent=5 // pred_check
        %p253 = pneg %p252
      $region42: #{tpu_custom_call.1} parent=5 // pred_check_branch
        %255 = sbr.rel (%p253) target = $region44
      $region43: #{tpu_custom_call.1} parent=5 // pred_region
        // Predicated region
        $region45: #{tpu_custom_call.1} parent=43 // pred_check
          %p256 = pneg %p37
        $region46: #{tpu_custom_call.1} parent=43 // pred_check_branch
          %258 = sbr.rel (%p256) target = $region48
        $region47: #{tpu_custom_call.1} parent=43 // pred_region
          %p259 = scmp.lt.s32.totalorder %s17, 1
          %s260 = scalar_select %p259, %s17, 1
          %s261 = smul.addr %s260, 4
          %s262 = smul.addr %s261, 8
          %s263 = scalar_lea.vmem %s0, %s262
        $region48: #{tpu_custom_call.1} parent=43 // pred_fallthru
          _
      $region44: #{tpu_custom_call.1} parent=5 // pred_fallthru
        _
      %p264 = scmp.le.s32.totalorder 1, %s17
      %p265 = scmp.lt.s32.totalorder %s17, 3
      %p266 = pnand %p264, %p265
      %p267 = pneg %p266
      // Predicated region
      $region49: #{tpu_custom_call.1} parent=5 // pred_check
        _
      $region50: #{tpu_custom_call.1} parent=5 // pred_check_branch
        %269 = sbr.rel (%p266) target = $region52
      $region51: #{tpu_custom_call.1} parent=5 // pred_region
        %s270 = ssub.s32 %s17, 1
        %p271 = scmp.lt.s32.totalorder %s22, 1
        %s272 = scalar_select %p271, %s22, 1
        %s273 = smul.addr %s272, 4
        %s274 = smul.addr %s273, 8
        %s275 = scalar_lea.vmem %s0, %s274
        %p276 = pneg %p43
        %p277 = pneg %p40
        %p278 = pneg %p64
        %p279 = pneg %p61
        %p280 = pneg %p85
        %p281 = pneg %p82
        %p282 = pneg %p106
        %p283 = pneg %p103
        %p284 = pneg %p127
        %p285 = pneg %p124
        %p286 = pneg %p148
        %p287 = pneg %p145
        %p288 = pneg %p169
        %p289 = pneg %p166
        %p290 = pneg %p190
        %p291 = pneg %p187
        %p292 = pneg %p216
        %p293 = pneg %p213
        %s294 = sand.u32 %s203, 1
        %s295 = scalar_lea.sflag [#allocation3], %s294
        %s296 = sand.u32 %s203, 1
        %s297 = smul.addr %s296, 32
        %s298 = scalar_lea.vmem [#allocation2], %s297
        %p299 = scmp.lt.s32.totalorder %s22, 1
        %s300 = scalar_select %p299, %s22, 1
        %s301 = smul.addr %s300, 4
        %s302 = smul.addr %s301, 8
        %s303 = scalar_lea.vmem %s0, %s302
        %v304 = vld [vmem:[%s303] sm:$0xff]
        %v305 = vld [vmem:[%s303 + $0x8] sm:$0xff]
        %v306 = vld [vmem:[%s303 + $0x10] sm:$0xff]
        %v307 = vld [vmem:[%s303 + $0x18] sm:$0xff]
        %v308 = vld [vmem:[%s1] sm:$0xf]
        %v309 = vld [vmem:[%s2] sm:$0xf]
        %311 = vset.pattern.permute.xlu0 0
        %312 = vperm.xlu0 %311, %v309
        %v313 = vpop.permute.xlu0 %312
        %vm315 = vcmask 130048
        %v317 = vsel %vm315, %v308, 0
        %319 = vmatprep.subr.mxu0 %v305
        %320 = vmatpush1.msra.mxu0 %v304
        %321 = vmatprep.subr.mxu0 %v307
        %322 = vmatpush1.msra.mxu0 %v306
        %323 = vmatprep.subr.mxu0 0.0
        %324 = vmatpush1.msra.mxu0 0.0
        %325 = vmatprep.subr.mxu0 0.0
        %326 = vmatpush1.msra.mxu0 0.0
        %327 = vmatprep.subr.mxu0 0.0
        %328 = vmatpush1.msra.mxu0 0.0
        %329 = vmatprep.subr.mxu0 0.0
        %330 = vmatpush1.msra.mxu0 0.0
        %331 = vmatprep.subr.mxu0 0.0
        %332 = vmatpush1.msra.mxu0 0.0
        %333 = vmatprep.subr.mxu0 0.0
        %334 = vmatpush1.msra.mxu0 0.0
        %335 = vmatprep.subr.mxu0 0.0
        %336 = vmatpush1.msra.mxu0 0.0
        %337 = vmatprep.subr.mxu0 0.0
        %338 = vmatpush1.msra.mxu0 0.0
        %339 = vmatprep.subr.mxu0 0.0
        %340 = vmatpush1.msra.mxu0 0.0
        %341 = vmatprep.subr.mxu0 0.0
        %342 = vmatpush1.msra.mxu0 0.0
        %343 = vmatprep.subr.mxu0 0.0
        %344 = vmatpush1.msra.mxu0 0.0
        %345 = vmatprep.subr.mxu0 0.0
        %346 = vmatpush1.msra.mxu0 0.0
        %347 = vmatprep.subr.mxu0 0.0
        %348 = vmatpush1.msra.mxu0 0.0
        %349 = vmatprep.subr.mxu0 0.0
        %350 = vmatpush1.msra.mxu0 0.0
        %351 = vmatprep.subr.mxu0 0.0
        %352 = vmatpush1.msra.mxu0 0.0
        %353 = vmatprep.subr.mxu0 0.0
        %354 = vmatpush1.msra.mxu0 0.0
        %355 = vmatprep.subr.mxu0 0.0
        %356 = vmatpush1.msra.mxu0 0.0
        %357 = vmatprep.subr.mxu0 0.0
        %358 = vmatpush1.msra.mxu0 0.0
        %359 = vmatprep.subr.mxu0 0.0
        %360 = vmatpush1.msra.mxu0 0.0
        %361 = vmatprep.subr.mxu0 0.0
        %362 = vmatpush1.msra.mxu0 0.0
        %363 = vmatprep.subr.mxu0 0.0
        %364 = vmatpush1.msra.mxu0 0.0
        %365 = vmatprep.subr.mxu0 0.0
        %366 = vmatpush1.msra.mxu0 0.0
        %367 = vmatprep.subr.mxu0 0.0
        %368 = vmatpush1.msra.mxu0 0.0
        %369 = vmatprep.subr.mxu0 0.0
        %370 = vmatpush1.msra.mxu0 0.0
        %371 = vmatprep.subr.mxu0 0.0
        %372 = vmatpush1.msra.mxu0 0.0
        %373 = vmatprep.subr.mxu0 0.0
        %374 = vmatpush1.msra.mxu0 0.0
        %375 = vmatprep.subr.mxu0 0.0
        %376 = vmatpush1.msra.mxu0 0.0
        %377 = vmatprep.subr.mxu0 0.0
        %378 = vmatpush1.msra.mxu0 0.0
        %379 = vmatprep.subr.mxu0 0.0
        %380 = vmatpush1.msra.mxu0 0.0
        %381 = vmatprep.subr.mxu0 0.0
        %382 = vmatpush1.msra.mxu0 0.0
        %383 = vmatprep.mubr.f32.mxu0 0.0
        %384 = vmatmul.mubr.f32.gmra.mrb[0].mxu0 %v317
        %v385 = vpop.f32.mrb[0].mxu0
        %v386 = vadd.f32 %v313, %v385
        %v387 = vpop.f32.mrb[0].mxu0
        %v388 = vadd.f32 %v313, %v387
        %389 = vdwg.mxu0
        %v390 = vmax.f32 %v386, 0.0
        %v391 = vmax.f32 %v388, 0.0
        %s392 = scalar_lea.vmem %s3, 16
        %v393 = vld [vmem:[%s392] sm:$0xf]
        %394 = vrot.lane.b32.xlu0 %v390, 17
        %v395 = vpop.permute.xlu0 %394
        %396 = vrot.lane.b32.xlu0 %v391, 17
        %v397 = vpop.permute.xlu0 %396
        %v398 = vlaneseq
        %v399 = vand.u32 %v398, 127
        %vm400 = vcmp.lt.s32.totalorder %v399, 17
        %v401 = vsel %vm400, %v395, %v397
        %v402 = vsel %vm400, %v397, %v395
        %v403 = vld [vmem:[%s3] sm:$0xf]
        %v404 = vld [vmem:[%s7] sm:$0x3]
        %v406 = vlaneseq
        %v407 = vshrl.u32 %v406, 7
        %v408 = vsub.s32 0, %v407
        %v409 = vrot.slane %v404, %v408
        %v410 = vlaneseq
        %v411 = vshrl.u32 %v410, 7
        %v412 = vsub.s32 1, %v411
        %v413 = vrot.slane %v404, %v412
        %v416 = vmul.f32 %v402, %v409
        %v417 = vmul.f32 %v401, %v413
        %vm418 = vcmask 31744
        %v420 = vsel %vm418, %v403, 0
        %vm422 = vcmask 1043456
        %v424 = vsel %vm422, %v416, 0
        %v427 = vsel %vm422, %v417, 0
        %429 = vmatprep.subr.mxu0 %v427
        %430 = vmatpush1.msra.mxu0 %v424
        %431 = vmatprep.subr.mxu0 0.0
        %432 = vmatpush1.msra.mxu0 0.0
        %433 = vmatprep.subr.mxu0 0.0
        %434 = vmatpush1.msra.mxu0 0.0
        %435 = vmatprep.subr.mxu0 0.0
        %436 = vmatpush1.msra.mxu0 0.0
        %437 = vmatprep.subr.mxu0 0.0
        %438 = vmatpush1.msra.mxu0 0.0
        %439 = vmatprep.subr.mxu0 0.0
        %440 = vmatpush1.msra.mxu0 0.0
        %441 = vmatprep.subr.mxu0 0.0
        %442 = vmatpush1.msra.mxu0 0.0
        %443 = vmatprep.subr.mxu0 0.0
        %444 = vmatpush1.msra.mxu0 0.0
        %445 = vmatprep.subr.mxu0 0.0
        %446 = vmatpush1.msra.mxu0 0.0
        %447 = vmatprep.subr.mxu0 0.0
        %448 = vmatpush1.msra.mxu0 0.0
        %449 = vmatprep.subr.mxu0 0.0
        %450 = vmatpush1.msra.mxu0 0.0
        %451 = vmatprep.subr.mxu0 0.0
        %452 = vmatpush1.msra.mxu0 0.0
        %453 = vmatprep.subr.mxu0 0.0
        %454 = vmatpush1.msra.mxu0 0.0
        %455 = vmatprep.subr.mxu0 0.0
        %456 = vmatpush1.msra.mxu0 0.0
        %457 = vmatprep.subr.mxu0 0.0
        %458 = vmatpush1.msra.mxu0 0.0
        %459 = vmatprep.subr.mxu0 0.0
        %460 = vmatpush1.msra.mxu0 0.0
        %461 = vmatprep.subr.mxu0 0.0
        %462 = vmatpush1.msra.mxu0 0.0
        %463 = vmatprep.subr.mxu0 0.0
        %464 = vmatpush1.msra.mxu0 0.0
        %465 = vmatprep.subr.mxu0 0.0
        %466 = vmatpush1.msra.mxu0 0.0
        %467 = vmatprep.subr.mxu0 0.0
        %468 = vmatpush1.msra.mxu0 0.0
        %469 = vmatprep.subr.mxu0 0.0
        %470 = vmatpush1.msra.mxu0 0.0
        %471 = vmatprep.subr.mxu0 0.0
        %472 = vmatpush1.msra.mxu0 0.0
        %473 = vmatprep.subr.mxu0 0.0
        %474 = vmatpush1.msra.mxu0 0.0
        %475 = vmatprep.subr.mxu0 0.0
        %476 = vmatpush1.msra.mxu0 0.0
        %477 = vmatprep.subr.mxu0 0.0
        %478 = vmatpush1.msra.mxu0 0.0
        %479 = vmatprep.subr.mxu0 0.0
        %480 = vmatpush1.msra.mxu0 0.0
        %481 = vmatprep.subr.mxu0 0.0
        %482 = vmatpush1.msra.mxu0 0.0
        %483 = vmatprep.subr.mxu0 0.0
        %484 = vmatpush1.msra.mxu0 0.0
        %485 = vmatprep.subr.mxu0 0.0
        %486 = vmatpush1.msra.mxu0 0.0
        %487 = vmatprep.subr.mxu0 0.0
        %488 = vmatpush1.msra.mxu0 0.0
        %489 = vmatprep.subr.mxu0 0.0
        %490 = vmatpush1.msra.mxu0 0.0
        %491 = vmatprep.subr.mxu0 0.0
        %492 = vmatpush1.msra.mxu0 0.0
        %493 = vmatprep.mubr.f32.mxu0 0.0
        %494 = vmatmul.mubr.f32.gmra.mrb[0].mxu0 %v420
        %v495 = vpop.f32.mrb[0].mxu0
        %v496 = vadd.f32 0.0, %v495
        %v497 = vpop.f32.mrb[0].mxu0
        %v498 = vadd.f32 0.0, %v497
        %499 = vdwg.mxu0
        %v501 = vsel %vm418, %v393, 0
        %v504 = vsel %vm422, %v390, 0
        %v507 = vsel %vm422, %v391, 0
        %509 = vmatprep.subr.mxu0 %v507
        %510 = vmatpush1.msra.mxu0 %v504
        %511 = vmatprep.subr.mxu0 0.0
        %512 = vmatpush1.msra.mxu0 0.0
        %513 = vmatprep.subr.mxu0 0.0
        %514 = vmatpush1.msra.mxu0 0.0
        %515 = vmatprep.subr.mxu0 0.0
        %516 = vmatpush1.msra.mxu0 0.0
        %517 = vmatprep.subr.mxu0 0.0
        %518 = vmatpush1.msra.mxu0 0.0
        %519 = vmatprep.subr.mxu0 0.0
        %520 = vmatpush1.msra.mxu0 0.0
        %521 = vmatprep.subr.mxu0 0.0
        %522 = vmatpush1.msra.mxu0 0.0
        %523 = vmatprep.subr.mxu0 0.0
        %524 = vmatpush1.msra.mxu0 0.0
        %525 = vmatprep.subr.mxu0 0.0
        %526 = vmatpush1.msra.mxu0 0.0
        %527 = vmatprep.subr.mxu0 0.0
        %528 = vmatpush1.msra.mxu0 0.0
        %529 = vmatprep.subr.mxu0 0.0
        %530 = vmatpush1.msra.mxu0 0.0
        %531 = vmatprep.subr.mxu0 0.0
        %532 = vmatpush1.msra.mxu0 0.0
        %533 = vmatprep.subr.mxu0 0.0
        %534 = vmatpush1.msra.mxu0 0.0
        %535 = vmatprep.subr.mxu0 0.0
        %536 = vmatpush1.msra.mxu0 0.0
        %537 = vmatprep.subr.mxu0 0.0
        %538 = vmatpush1.msra.mxu0 0.0
        %539 = vmatprep.subr.mxu0 0.0
        %540 = vmatpush1.msra.mxu0 0.0
        %541 = vmatprep.subr.mxu0 0.0
        %542 = vmatpush1.msra.mxu0 0.0
        %543 = vmatprep.subr.mxu0 0.0
        %544 = vmatpush1.msra.mxu0 0.0
        %545 = vmatprep.subr.mxu0 0.0
        %546 = vmatpush1.msra.mxu0 0.0
        %547 = vmatprep.subr.mxu0 0.0
        %548 = vmatpush1.msra.mxu0 0.0
        %549 = vmatprep.subr.mxu0 0.0
        %550 = vmatpush1.msra.mxu0 0.0
        %551 = vmatprep.subr.mxu0 0.0
        %552 = vmatpush1.msra.mxu0 0.0
        %553 = vmatprep.subr.mxu0 0.0
        %554 = vmatpush1.msra.mxu0 0.0
        %555 = vmatprep.subr.mxu0 0.0
        %556 = vmatpush1.msra.mxu0 0.0
        %557 = vmatprep.subr.mxu0 0.0
        %558 = vmatpush1.msra.mxu0 0.0
        %559 = vmatprep.subr.mxu0 0.0
        %560 = vmatpush1.msra.mxu0 0.0
        %561 = vmatprep.subr.mxu0 0.0
        %562 = vmatpush1.msra.mxu0 0.0
        %563 = vmatprep.subr.mxu0 0.0
        %564 = vmatpush1.msra.mxu0 0.0
        %565 = vmatprep.subr.mxu0 0.0
        %566 = vmatpush1.msra.mxu0 0.0
        %567 = vmatprep.subr.mxu0 0.0
        %568 = vmatpush1.msra.mxu0 0.0
        %569 = vmatprep.subr.mxu0 0.0
        %570 = vmatpush1.msra.mxu0 0.0
        %571 = vmatprep.subr.mxu0 0.0
        %572 = vmatpush1.msra.mxu0 0.0
        %573 = vmatprep.mubr.f32.mxu0 0.0
        %574 = vmatmul.mubr.f32.gmra.mrb[0].mxu0 %v501
        %v575 = vpop.f32.mrb[0].mxu0
        %v576 = vadd.f32 %v496, %v575
        %v577 = vpop.f32.mrb[0].mxu0
        %v578 = vadd.f32 %v498, %v577
        %579 = vdwg.mxu0
        %580 = vrot.lane.b32.xlu0 %v390, 16
        %v581 = vpop.permute.xlu0 %580
        %582 = vrot.lane.b32.xlu0 %v391, 16
        %v583 = vpop.permute.xlu0 %582
        %vm584 = vcmp.lt.s32.totalorder %v399, 16
        %v585 = vsel %vm584, %v581, %v583
        %v586 = vsel %vm584, %v583, %v581
        %s587 = scalar_lea.vmem %s3, 4
        %v588 = vld [vmem:[%s587] sm:$0xf]
        %s589 = scalar_lea.vmem %s7, 2
        %v590 = vld [vmem:[%s589] sm:$0x3]
        %v592 = vlaneseq
        %v593 = vshrl.u32 %v592, 7
        %v594 = vsub.s32 0, %v593
        %v595 = vrot.slane %v590, %v594
        %v596 = vlaneseq
        %v597 = vshrl.u32 %v596, 7
        %v598 = vsub.s32 1, %v597
        %v599 = vrot.slane %v590, %v598
        %v602 = vmul.f32 %v586, %v595
        %v603 = vmul.f32 %v585, %v599
        %v605 = vsel %vm418, %v588, 0
        %v608 = vsel %vm422, %v602, 0
        %v611 = vsel %vm422, %v603, 0
        %613 = vmatprep.subr.mxu0 %v611
        %614 = vmatpush1.msra.mxu0 %v608
        %615 = vmatprep.subr.mxu0 0.0
        %616 = vmatpush1.msra.mxu0 0.0
        %617 = vmatprep.subr.mxu0 0.0
        %618 = vmatpush1.msra.mxu0 0.0
        %619 = vmatprep.subr.mxu0 0.0
        %620 = vmatpush1.msra.mxu0 0.0
        %621 = vmatprep.subr.mxu0 0.0
        %622 = vmatpush1.msra.mxu0 0.0
        %623 = vmatprep.subr.mxu0 0.0
        %624 = vmatpush1.msra.mxu0 0.0
        %625 = vmatprep.subr.mxu0 0.0
        %626 = vmatpush1.msra.mxu0 0.0
        %627 = vmatprep.subr.mxu0 0.0
        %628 = vmatpush1.msra.mxu0 0.0
        %629 = vmatprep.subr.mxu0 0.0
        %630 = vmatpush1.msra.mxu0 0.0
        %631 = vmatprep.subr.mxu0 0.0
        %632 = vmatpush1.msra.mxu0 0.0
        %633 = vmatprep.subr.mxu0 0.0
        %634 = vmatpush1.msra.mxu0 0.0
        %635 = vmatprep.subr.mxu0 0.0
        %636 = vmatpush1.msra.mxu0 0.0
        %637 = vmatprep.subr.mxu0 0.0
        %638 = vmatpush1.msra.mxu0 0.0
        %639 = vmatprep.subr.mxu0 0.0
        %640 = vmatpush1.msra.mxu0 0.0
        %641 = vmatprep.subr.mxu0 0.0
        %642 = vmatpush1.msra.mxu0 0.0
        %643 = vmatprep.subr.mxu0 0.0
        %644 = vmatpush1.msra.mxu0 0.0
        %645 = vmatprep.subr.mxu0 0.0
        %646 = vmatpush1.msra.mxu0 0.0
        %647 = vmatprep.subr.mxu0 0.0
        %648 = vmatpush1.msra.mxu0 0.0
        %649 = vmatprep.subr.mxu0 0.0
        %650 = vmatpush1.msra.mxu0 0.0
        %651 = vmatprep.subr.mxu0 0.0
        %652 = vmatpush1.msra.mxu0 0.0
        %653 = vmatprep.subr.mxu0 0.0
        %654 = vmatpush1.msra.mxu0 0.0
        %655 = vmatprep.subr.mxu0 0.0
        %656 = vmatpush1.msra.mxu0 0.0
        %657 = vmatprep.subr.mxu0 0.0
        %658 = vmatpush1.msra.mxu0 0.0
        %659 = vmatprep.subr.mxu0 0.0
        %660 = vmatpush1.msra.mxu0 0.0
        %661 = vmatprep.subr.mxu0 0.0
        %662 = vmatpush1.msra.mxu0 0.0
        %663 = vmatprep.subr.mxu0 0.0
        %664 = vmatpush1.msra.mxu0 0.0
        %665 = vmatprep.subr.mxu0 0.0
        %666 = vmatpush1.msra.mxu0 0.0
        %667 = vmatprep.subr.mxu0 0.0
        %668 = vmatpush1.msra.mxu0 0.0
        %669 = vmatprep.subr.mxu0 0.0
        %670 = vmatpush1.msra.mxu0 0.0
        %671 = vmatprep.subr.mxu0 0.0
        %672 = vmatpush1.msra.mxu0 0.0
        %673 = vmatprep.subr.mxu0 0.0
        %674 = vmatpush1.msra.mxu0 0.0
        %675 = vmatprep.subr.mxu0 0.0
        %676 = vmatpush1.msra.mxu0 0.0
        %677 = vmatprep.mubr.f32.mxu0 0.0
        %678 = vmatmul.mubr.f32.gmra.mrb[0].mxu0 %v605
        %v679 = vpop.f32.mrb[0].mxu0
        %v680 = vadd.f32 0.0, %v679
        %v681 = vpop.f32.mrb[0].mxu0
        %v682 = vadd.f32 0.0, %v681
        %683 = vdwg.mxu0
        %v684 = vadd.f32 %v576, %v680
        %v685 = vadd.f32 %v578, %v682
        %686 = vrot.lane.b32.xlu0 %v390, 15
        %v687 = vpop.permute.xlu0 %686
        %688 = vrot.lane.b32.xlu0 %v391, 15
        %v689 = vpop.permute.xlu0 %688
        %vm690 = vcmp.lt.s32.totalorder %v399, 15
        %v691 = vsel %vm690, %v687, %v689
        %v692 = vsel %vm690, %v689, %v687
        %s693 = scalar_lea.vmem %s3, 8
        %v694 = vld [vmem:[%s693] sm:$0xf]
        %s695 = scalar_lea.vmem %s7, 4
        %v696 = vld [vmem:[%s695] sm:$0x3]
        %v698 = vlaneseq
        %v699 = vshrl.u32 %v698, 7
        %v700 = vsub.s32 0, %v699
        %v701 = vrot.slane %v696, %v700
        %v702 = vlaneseq
        %v703 = vshrl.u32 %v702, 7
        %v704 = vsub.s32 1, %v703
        %v705 = vrot.slane %v696, %v704
        %v708 = vmul.f32 %v692, %v701
        %v709 = vmul.f32 %v691, %v705
        %v711 = vsel %vm418, %v694, 0
        %v714 = vsel %vm422, %v708, 0
        %v717 = vsel %vm422, %v709, 0
        %719 = vmatprep.subr.mxu0 %v717
        %720 = vmatpush1.msra.mxu0 %v714
        %721 = vmatprep.subr.mxu0 0.0
        %722 = vmatpush1.msra.mxu0 0.0
        %723 = vmatprep.subr.mxu0 0.0
        %724 = vmatpush1.msra.mxu0 0.0
        %725 = vmatprep.subr.mxu0 0.0
        %726 = vmatpush1.msra.mxu0 0.0
        %727 = vmatprep.subr.mxu0 0.0
        %728 = vmatpush1.msra.mxu0 0.0
        %729 = vmatprep.subr.mxu0 0.0
        %730 = vmatpush1.msra.mxu0 0.0
        %731 = vmatprep.subr.mxu0 0.0
        %732 = vmatpush1.msra.mxu0 0.0
        %733 = vmatprep.subr.mxu0 0.0
        %734 = vmatpush1.msra.mxu0 0.0
        %735 = vmatprep.subr.mxu0 0.0
        %736 = vmatpush1.msra.mxu0 0.0
        %737 = vmatprep.subr.mxu0 0.0
        %738 = vmatpush1.msra.mxu0 0.0
        %739 = vmatprep.subr.mxu0 0.0
        %740 = vmatpush1.msra.mxu0 0.0
        %741 = vmatprep.subr.mxu0 0.0
        %742 = vmatpush1.msra.mxu0 0.0
        %743 = vmatprep.subr.mxu0 0.0
        %744 = vmatpush1.msra.mxu0 0.0
        %745 = vmatprep.subr.mxu0 0.0
        %746 = vmatpush1.msra.mxu0 0.0
        %747 = vmatprep.subr.mxu0 0.0
        %748 = vmatpush1.msra.mxu0 0.0
        %749 = vmatprep.subr.mxu0 0.0
        %750 = vmatpush1.msra.mxu0 0.0
        %751 = vmatprep.subr.mxu0 0.0
        %752 = vmatpush1.msra.mxu0 0.0
        %753 = vmatprep.subr.mxu0 0.0
        %754 = vmatpush1.msra.mxu0 0.0
        %755 = vmatprep.subr.mxu0 0.0
        %756 = vmatpush1.msra.mxu0 0.0
        %757 = vmatprep.subr.mxu0 0.0
        %758 = vmatpush1.msra.mxu0 0.0
        %759 = vmatprep.subr.mxu0 0.0
        %760 = vmatpush1.msra.mxu0 0.0
        %761 = vmatprep.subr.mxu0 0.0
        %762 = vmatpush1.msra.mxu0 0.0
        %763 = vmatprep.subr.mxu0 0.0
        %764 = vmatpush1.msra.mxu0 0.0
        %765 = vmatprep.subr.mxu0 0.0
        %766 = vmatpush1.msra.mxu0 0.0
        %767 = vmatprep.subr.mxu0 0.0
        %768 = vmatpush1.msra.mxu0 0.0
        %769 = vmatprep.subr.mxu0 0.0
        %770 = vmatpush1.msra.mxu0 0.0
        %771 = vmatprep.subr.mxu0 0.0
        %772 = vmatpush1.msra.mxu0 0.0
        %773 = vmatprep.subr.mxu0 0.0
        %774 = vmatpush1.msra.mxu0 0.0
        %775 = vmatprep.subr.mxu0 0.0
        %776 = vmatpush1.msra.mxu0 0.0
        %777 = vmatprep.subr.mxu0 0.0
        %778 = vmatpush1.msra.mxu0 0.0
        %779 = vmatprep.subr.mxu0 0.0
        %780 = vmatpush1.msra.mxu0 0.0
        %781 = vmatprep.subr.mxu0 0.0
        %782 = vmatpush1.msra.mxu0 0.0
        %783 = vmatprep.mubr.f32.mxu0 0.0
        %784 = vmatmul.mubr.f32.gmra.mrb[0].mxu0 %v711
        %v785 = vpop.f32.mrb[0].mxu0
        %v786 = vadd.f32 0.0, %v785
        %v787 = vpop.f32.mrb[0].mxu0
        %v788 = vadd.f32 0.0, %v787
        %789 = vdwg.mxu0
        %v790 = vadd.f32 %v684, %v786
        %v791 = vadd.f32 %v685, %v788
        %792 = vrot.lane.b32.xlu0 %v390, 1
        %v793 = vpop.permute.xlu0 %792
        %794 = vrot.lane.b32.xlu0 %v391, 1
        %v795 = vpop.permute.xlu0 %794
        %vm796 = vcmp.lt.s32.totalorder %v399, 1
        %v797 = vsel %vm796, %v793, %v795
        %v798 = vsel %vm796, %v795, %v793
        %s799 = scalar_lea.vmem %s3, 12
        %v800 = vld [vmem:[%s799] sm:$0xf]
        %s801 = scalar_lea.vmem %s7, 6
        %v802 = vld [vmem:[%s801] sm:$0x3]
        %v804 = vlaneseq
        %v805 = vshrl.u32 %v804, 7
        %v806 = vsub.s32 0, %v805
        %v807 = vrot.slane %v802, %v806
        %v808 = vlaneseq
        %v809 = vshrl.u32 %v808, 7
        %v810 = vsub.s32 1, %v809
        %v811 = vrot.slane %v802, %v810
        %v814 = vmul.f32 %v798, %v807
        %v815 = vmul.f32 %v797, %v811
        %v817 = vsel %vm418, %v800, 0
        %v820 = vsel %vm422, %v814, 0
        %v823 = vsel %vm422, %v815, 0
        %825 = vmatprep.subr.mxu0 %v823
        %826 = vmatpush1.msra.mxu0 %v820
        %827 = vmatprep.subr.mxu0 0.0
        %828 = vmatpush1.msra.mxu0 0.0
        %829 = vmatprep.subr.mxu0 0.0
        %830 = vmatpush1.msra.mxu0 0.0
        %831 = vmatprep.subr.mxu0 0.0
        %832 = vmatpush1.msra.mxu0 0.0
        %833 = vmatprep.subr.mxu0 0.0
        %834 = vmatpush1.msra.mxu0 0.0
        %835 = vmatprep.subr.mxu0 0.0
        %836 = vmatpush1.msra.mxu0 0.0
        %837 = vmatprep.subr.mxu0 0.0
        %838 = vmatpush1.msra.mxu0 0.0
        %839 = vmatprep.subr.mxu0 0.0
        %840 = vmatpush1.msra.mxu0 0.0
        %841 = vmatprep.subr.mxu0 0.0
        %842 = vmatpush1.msra.mxu0 0.0
        %843 = vmatprep.subr.mxu0 0.0
        %844 = vmatpush1.msra.mxu0 0.0
        %845 = vmatprep.subr.mxu0 0.0
        %846 = vmatpush1.msra.mxu0 0.0
        %847 = vmatprep.subr.mxu0 0.0
        %848 = vmatpush1.msra.mxu0 0.0
        %849 = vmatprep.subr.mxu0 0.0
        %850 = vmatpush1.msra.mxu0 0.0
        %851 = vmatprep.subr.mxu0 0.0
        %852 = vmatpush1.msra.mxu0 0.0
        %853 = vmatprep.subr.mxu0 0.0
        %854 = vmatpush1.msra.mxu0 0.0
        %855 = vmatprep.subr.mxu0 0.0
        %856 = vmatpush1.msra.mxu0 0.0
        %857 = vmatprep.subr.mxu0 0.0
        %858 = vmatpush1.msra.mxu0 0.0
        %859 = vmatprep.subr.mxu0 0.0
        %860 = vmatpush1.msra.mxu0 0.0
        %861 = vmatprep.subr.mxu0 0.0
        %862 = vmatpush1.msra.mxu0 0.0
        %863 = vmatprep.subr.mxu0 0.0
        %864 = vmatpush1.msra.mxu0 0.0
        %865 = vmatprep.subr.mxu0 0.0
        %866 = vmatpush1.msra.mxu0 0.0
        %867 = vmatprep.subr.mxu0 0.0
        %868 = vmatpush1.msra.mxu0 0.0
        %869 = vmatprep.subr.mxu0 0.0
        %870 = vmatpush1.msra.mxu0 0.0
        %871 = vmatprep.subr.mxu0 0.0
        %872 = vmatpush1.msra.mxu0 0.0
        %873 = vmatprep.subr.mxu0 0.0
        %874 = vmatpush1.msra.mxu0 0.0
        %875 = vmatprep.subr.mxu0 0.0
        %876 = vmatpush1.msra.mxu0 0.0
        %877 = vmatprep.subr.mxu0 0.0
        %878 = vmatpush1.msra.mxu0 0.0
        %879 = vmatprep.subr.mxu0 0.0
        %880 = vmatpush1.msra.mxu0 0.0
        %881 = vmatprep.subr.mxu0 0.0
        %882 = vmatpush1.msra.mxu0 0.0
        %883 = vmatprep.subr.mxu0 0.0
        %884 = vmatpush1.msra.mxu0 0.0
        %885 = vmatprep.subr.mxu0 0.0
        %886 = vmatpush1.msra.mxu0 0.0
        %887 = vmatprep.subr.mxu0 0.0
        %888 = vmatpush1.msra.mxu0 0.0
        %889 = vmatprep.mubr.f32.mxu0 0.0
        %890 = vmatmul.mubr.f32.gmra.mrb[0].mxu0 %v817
        %v891 = vpop.f32.mrb[0].mxu0
        %v892 = vadd.f32 0.0, %v891
        %v893 = vpop.f32.mrb[0].mxu0
        %v894 = vadd.f32 0.0, %v893
        %895 = vdwg.mxu0
        %v896 = vadd.f32 %v790, %v892
        %v897 = vadd.f32 %v791, %v894
        %898 = vrot.lane.b32.xlu0 %v390, 127
        %v899 = vpop.permute.xlu0 %898
        %900 = vrot.lane.b32.xlu0 %v391, 127
        %v901 = vpop.permute.xlu0 %900
        %vm902 = vcmp.lt.s32.totalorder %v399, 127
        %v903 = vsel %vm902, %v899, %v901
        %v904 = vsel %vm902, %v901, %v899
        %s905 = scalar_lea.vmem %s3, 20
        %v906 = vld [vmem:[%s905] sm:$0xf]
        %s907 = scalar_lea.vmem %s7, 10
        %v908 = vld [vmem:[%s907] sm:$0x3]
        %v910 = vlaneseq
        %v911 = vshrl.u32 %v910, 7
        %v912 = vsub.s32 0, %v911
        %v913 = vrot.slane %v908, %v912
        %v914 = vlaneseq
        %v915 = vshrl.u32 %v914, 7
        %v916 = vsub.s32 1, %v915
        %v917 = vrot.slane %v908, %v916
        %v920 = vmul.f32 %v903, %v913
        %v921 = vmul.f32 %v904, %v917
        %v923 = vsel %vm418, %v906, 0
        %v926 = vsel %vm422, %v920, 0
        %v929 = vsel %vm422, %v921, 0
        %931 = vmatprep.subr.mxu0 %v929
        %932 = vmatpush1.msra.mxu0 %v926
        %933 = vmatprep.subr.mxu0 0.0
        %934 = vmatpush1.msra.mxu0 0.0
        %935 = vmatprep.subr.mxu0 0.0
        %936 = vmatpush1.msra.mxu0 0.0
        %937 = vmatprep.subr.mxu0 0.0
        %938 = vmatpush1.msra.mxu0 0.0
        %939 = vmatprep.subr.mxu0 0.0
        %940 = vmatpush1.msra.mxu0 0.0
        %941 = vmatprep.subr.mxu0 0.0
        %942 = vmatpush1.msra.mxu0 0.0
        %943 = vmatprep.subr.mxu0 0.0
        %944 = vmatpush1.msra.mxu0 0.0
        %945 = vmatprep.subr.mxu0 0.0
        %946 = vmatpush1.msra.mxu0 0.0
        %947 = vmatprep.subr.mxu0 0.0
        %948 = vmatpush1.msra.mxu0 0.0
        %949 = vmatprep.subr.mxu0 0.0
        %950 = vmatpush1.msra.mxu0 0.0
        %951 = vmatprep.subr.mxu0 0.0
        %952 = vmatpush1.msra.mxu0 0.0
        %953 = vmatprep.subr.mxu0 0.0
        %954 = vmatpush1.msra.mxu0 0.0
        %955 = vmatprep.subr.mxu0 0.0
        %956 = vmatpush1.msra.mxu0 0.0
        %957 = vmatprep.subr.mxu0 0.0
        %958 = vmatpush1.msra.mxu0 0.0
        %959 = vmatprep.subr.mxu0 0.0
        %960 = vmatpush1.msra.mxu0 0.0
        %961 = vmatprep.subr.mxu0 0.0
        %962 = vmatpush1.msra.mxu0 0.0
        %963 = vmatprep.subr.mxu0 0.0
        %964 = vmatpush1.msra.mxu0 0.0
        %965 = vmatprep.subr.mxu0 0.0
        %966 = vmatpush1.msra.mxu0 0.0
        %967 = vmatprep.subr.mxu0 0.0
        %968 = vmatpush1.msra.mxu0 0.0
        %969 = vmatprep.subr.mxu0 0.0
        %970 = vmatpush1.msra.mxu0 0.0
        %971 = vmatprep.subr.mxu0 0.0
        %972 = vmatpush1.msra.mxu0 0.0
        %973 = vmatprep.subr.mxu0 0.0
        %974 = vmatpush1.msra.mxu0 0.0
        %975 = vmatprep.subr.mxu0 0.0
        %976 = vmatpush1.msra.mxu0 0.0
        %977 = vmatprep.subr.mxu0 0.0
        %978 = vmatpush1.msra.mxu0 0.0
        %979 = vmatprep.subr.mxu0 0.0
        %980 = vmatpush1.msra.mxu0 0.0
        %981 = vmatprep.subr.mxu0 0.0
        %982 = vmatpush1.msra.mxu0 0.0
        %983 = vmatprep.subr.mxu0 0.0
        %984 = vmatpush1.msra.mxu0 0.0
        %985 = vmatprep.subr.mxu0 0.0
        %986 = vmatpush1.msra.mxu0 0.0
        %987 = vmatprep.subr.mxu0 0.0
        %988 = vmatpush1.msra.mxu0 0.0
        %989 = vmatprep.subr.mxu0 0.0
        %990 = vmatpush1.msra.mxu0 0.0
        %991 = vmatprep.subr.mxu0 0.0
        %992 = vmatpush1.msra.mxu0 0.0
        %993 = vmatprep.subr.mxu0 0.0
        %994 = vmatpush1.msra.mxu0 0.0
        %995 = vmatprep.mubr.f32.mxu0 0.0
        %996 = vmatmul.mubr.f32.gmra.mrb[0].mxu0 %v923
        %v997 = vpop.f32.mrb[0].mxu0
        %v998 = vadd.f32 0.0, %v997
        %v999 = vpop.f32.mrb[0].mxu0
        %v1000 = vadd.f32 0.0, %v999
        %1001 = vdwg.mxu0
        %v1002 = vadd.f32 %v896, %v998
        %v1003 = vadd.f32 %v897, %v1000
        %1004 = vrot.lane.b32.xlu0 %v390, 113
        %v1005 = vpop.permute.xlu0 %1004
        %1006 = vrot.lane.b32.xlu0 %v391, 113
        %v1007 = vpop.permute.xlu0 %1006
        %vm1008 = vcmp.lt.s32.totalorder %v399, 113
        %v1009 = vsel %vm1008, %v1005, %v1007
        %v1010 = vsel %vm1008, %v1007, %v1005
        %s1011 = scalar_lea.vmem %s3, 24
        %v1012 = vld [vmem:[%s1011] sm:$0xf]
        %s1013 = scalar_lea.vmem %s7, 12
        %v1014 = vld [vmem:[%s1013] sm:$0x3]
        %v1016 = vlaneseq
        %v1017 = vshrl.u32 %v1016, 7
        %v1018 = vsub.s32 0, %v1017
        %v1019 = vrot.slane %v1014, %v1018
        %v1020 = vlaneseq
        %v1021 = vshrl.u32 %v1020, 7
        %v1022 = vsub.s32 1, %v1021
        %v1023 = vrot.slane %v1014, %v1022
        %v1026 = vmul.f32 %v1009, %v1019
        %v1027 = vmul.f32 %v1010, %v1023
        %v1029 = vsel %vm418, %v1012, 0
        %v1032 = vsel %vm422, %v1026, 0
        %v1035 = vsel %vm422, %v1027, 0
        %1037 = vmatprep.subr.mxu0 %v1035
        %1038 = vmatpush1.msra.mxu0 %v1032
        %1039 = vmatprep.subr.mxu0 0.0
        %1040 = vmatpush1.msra.mxu0 0.0
        %1041 = vmatprep.subr.mxu0 0.0
        %1042 = vmatpush1.msra.mxu0 0.0
        %1043 = vmatprep.subr.mxu0 0.0
        %1044 = vmatpush1.msra.mxu0 0.0
        %1045 = vmatprep.subr.mxu0 0.0
        %1046 = vmatpush1.msra.mxu0 0.0
        %1047 = vmatprep.subr.mxu0 0.0
        %1048 = vmatpush1.msra.mxu0 0.0
        %1049 = vmatprep.subr.mxu0 0.0
        %1050 = vmatpush1.msra.mxu0 0.0
        %1051 = vmatprep.subr.mxu0 0.0
        %1052 = vmatpush1.msra.mxu0 0.0
        %1053 = vmatprep.subr.mxu0 0.0
        %1054 = vmatpush1.msra.mxu0 0.0
        %1055 = vmatprep.subr.mxu0 0.0
        %1056 = vmatpush1.msra.mxu0 0.0
        %1057 = vmatprep.subr.mxu0 0.0
        %1058 = vmatpush1.msra.mxu0 0.0
        %1059 = vmatprep.subr.mxu0 0.0
        %1060 = vmatpush1.msra.mxu0 0.0
        %1061 = vmatprep.subr.mxu0 0.0
        %1062 = vmatpush1.msra.mxu0 0.0
        %1063 = vmatprep.subr.mxu0 0.0
        %1064 = vmatpush1.msra.mxu0 0.0
        %1065 = vmatprep.subr.mxu0 0.0
        %1066 = vmatpush1.msra.mxu0 0.0
        %1067 = vmatprep.subr.mxu0 0.0
        %1068 = vmatpush1.msra.mxu0 0.0
        %1069 = vmatprep.subr.mxu0 0.0
        %1070 = vmatpush1.msra.mxu0 0.0
        %1071 = vmatprep.subr.mxu0 0.0
        %1072 = vmatpush1.msra.mxu0 0.0
        %1073 = vmatprep.subr.mxu0 0.0
        %1074 = vmatpush1.msra.mxu0 0.0
        %1075 = vmatprep.subr.mxu0 0.0
        %1076 = vmatpush1.msra.mxu0 0.0
        %1077 = vmatprep.subr.mxu0 0.0
        %1078 = vmatpush1.msra.mxu0 0.0
        %1079 = vmatprep.subr.mxu0 0.0
        %1080 = vmatpush1.msra.mxu0 0.0
        %1081 = vmatprep.subr.mxu0 0.0
        %1082 = vmatpush1.msra.mxu0 0.0
        %1083 = vmatprep.subr.mxu0 0.0
        %1084 = vmatpush1.msra.mxu0 0.0
        %1085 = vmatprep.subr.mxu0 0.0
        %1086 = vmatpush1.msra.mxu0 0.0
        %1087 = vmatprep.subr.mxu0 0.0
        %1088 = vmatpush1.msra.mxu0 0.0
        %1089 = vmatprep.subr.mxu0 0.0
        %1090 = vmatpush1.msra.mxu0 0.0
        %1091 = vmatprep.subr.mxu0 0.0
        %1092 = vmatpush1.msra.mxu0 0.0
        %1093 = vmatprep.subr.mxu0 0.0
        %1094 = vmatpush1.msra.mxu0 0.0
        %1095 = vmatprep.subr.mxu0 0.0
        %1096 = vmatpush1.msra.mxu0 0.0
        %1097 = vmatprep.subr.mxu0 0.0
        %1098 = vmatpush1.msra.mxu0 0.0
        %1099 = vmatprep.subr.mxu0 0.0
        %1100 = vmatpush1.msra.mxu0 0.0
        %1101 = vmatprep.mubr.f32.mxu0 0.0
        %1102 = vmatmul.mubr.f32.gmra.mrb[0].mxu0 %v1029
        %v1103 = vpop.f32.mrb[0].mxu0
        %v1104 = vadd.f32 0.0, %v1103
        %v1105 = vpop.f32.mrb[0].mxu0
        %v1106 = vadd.f32 0.0, %v1105
        %1107 = vdwg.mxu0
        %v1108 = vadd.f32 %v1002, %v1104
        %v1109 = vadd.f32 %v1003, %v1106
        %1110 = vrot.lane.b32.xlu0 %v390, 112
        %v1111 = vpop.permute.xlu0 %1110
        %1112 = vrot.lane.b32.xlu0 %v391, 112
        %v1113 = vpop.permute.xlu0 %1112
        %vm1114 = vcmp.lt.s32.totalorder %v399, 112
        %v1115 = vsel %vm1114, %v1111, %v1113
        %v1116 = vsel %vm1114, %v1113, %v1111
        %s1117 = scalar_lea.vmem %s3, 28
        %v1118 = vld [vmem:[%s1117] sm:$0xf]
        %s1119 = scalar_lea.vmem %s7, 14
        %v1120 = vld [vmem:[%s1119] sm:$0x3]
        %v1122 = vlaneseq
        %v1123 = vshrl.u32 %v1122, 7
        %v1124 = vsub.s32 0, %v1123
        %v1125 = vrot.slane %v1120, %v1124
        %v1126 = vlaneseq
        %v1127 = vshrl.u32 %v1126, 7
        %v1128 = vsub.s32 1, %v1127
        %v1129 = vrot.slane %v1120, %v1128
        %v1132 = vmul.f32 %v1115, %v1125
        %v1133 = vmul.f32 %v1116, %v1129
        %v1135 = vsel %vm418, %v1118, 0
        %v1138 = vsel %vm422, %v1132, 0
        %v1141 = vsel %vm422, %v1133, 0
        %1143 = vmatprep.subr.mxu0 %v1141
        %1144 = vmatpush1.msra.mxu0 %v1138
        %1145 = vmatprep.subr.mxu0 0.0
        %1146 = vmatpush1.msra.mxu0 0.0
        %1147 = vmatprep.subr.mxu0 0.0
        %1148 = vmatpush1.msra.mxu0 0.0
        %1149 = vmatprep.subr.mxu0 0.0
        %1150 = vmatpush1.msra.mxu0 0.0
        %1151 = vmatprep.subr.mxu0 0.0
        %1152 = vmatpush1.msra.mxu0 0.0
        %1153 = vmatprep.subr.mxu0 0.0
        %1154 = vmatpush1.msra.mxu0 0.0
        %1155 = vmatprep.subr.mxu0 0.0
        %1156 = vmatpush1.msra.mxu0 0.0
        %1157 = vmatprep.subr.mxu0 0.0
        %1158 = vmatpush1.msra.mxu0 0.0
        %1159 = vmatprep.subr.mxu0 0.0
        %1160 = vmatpush1.msra.mxu0 0.0
        %1161 = vmatprep.subr.mxu0 0.0
        %1162 = vmatpush1.msra.mxu0 0.0
        %1163 = vmatprep.subr.mxu0 0.0
        %1164 = vmatpush1.msra.mxu0 0.0
        %1165 = vmatprep.subr.mxu0 0.0
        %1166 = vmatpush1.msra.mxu0 0.0
        %1167 = vmatprep.subr.mxu0 0.0
        %1168 = vmatpush1.msra.mxu0 0.0
        %1169 = vmatprep.subr.mxu0 0.0
        %1170 = vmatpush1.msra.mxu0 0.0
        %1171 = vmatprep.subr.mxu0 0.0
        %1172 = vmatpush1.msra.mxu0 0.0
        %1173 = vmatprep.subr.mxu0 0.0
        %1174 = vmatpush1.msra.mxu0 0.0
        %1175 = vmatprep.subr.mxu0 0.0
        %1176 = vmatpush1.msra.mxu0 0.0
        %1177 = vmatprep.subr.mxu0 0.0
        %1178 = vmatpush1.msra.mxu0 0.0
        %1179 = vmatprep.subr.mxu0 0.0
        %1180 = vmatpush1.msra.mxu0 0.0
        %1181 = vmatprep.subr.mxu0 0.0
        %1182 = vmatpush1.msra.mxu0 0.0
        %1183 = vmatprep.subr.mxu0 0.0
        %1184 = vmatpush1.msra.mxu0 0.0
        %1185 = vmatprep.subr.mxu0 0.0
        %1186 = vmatpush1.msra.mxu0 0.0
        %1187 = vmatprep.subr.mxu0 0.0
        %1188 = vmatpush1.msra.mxu0 0.0
        %1189 = vmatprep.subr.mxu0 0.0
        %1190 = vmatpush1.msra.mxu0 0.0
        %1191 = vmatprep.subr.mxu0 0.0
        %1192 = vmatpush1.msra.mxu0 0.0
        %1193 = vmatprep.subr.mxu0 0.0
        %1194 = vmatpush1.msra.mxu0 0.0
        %1195 = vmatprep.subr.mxu0 0.0
        %1196 = vmatpush1.msra.mxu0 0.0
        %1197 = vmatprep.subr.mxu0 0.0
        %1198 = vmatpush1.msra.mxu0 0.0
        %1199 = vmatprep.subr.mxu0 0.0
        %1200 = vmatpush1.msra.mxu0 0.0
        %1201 = vmatprep.subr.mxu0 0.0
        %1202 = vmatpush1.msra.mxu0 0.0
        %1203 = vmatprep.subr.mxu0 0.0
        %1204 = vmatpush1.msra.mxu0 0.0
        %1205 = vmatprep.subr.mxu0 0.0
        %1206 = vmatpush1.msra.mxu0 0.0
        %1207 = vmatprep.mubr.f32.mxu0 0.0
        %1208 = vmatmul.mubr.f32.gmra.mrb[0].mxu0 %v1135
        %v1209 = vpop.f32.mrb[0].mxu0
        %v1210 = vadd.f32 0.0, %v1209
        %v1211 = vpop.f32.mrb[0].mxu0
        %v1212 = vadd.f32 0.0, %v1211
        %1213 = vdwg.mxu0
        %v1214 = vadd.f32 %v1108, %v1210
        %v1215 = vadd.f32 %v1109, %v1212
        %1216 = vrot.lane.b32.xlu0 %v390, 111
        %v1217 = vpop.permute.xlu0 %1216
        %1218 = vrot.lane.b32.xlu0 %v391, 111
        %v1219 = vpop.permute.xlu0 %1218
        %vm1220 = vcmp.lt.s32.totalorder %v399, 111
        %v1221 = vsel %vm1220, %v1217, %v1219
        %v1222 = vsel %vm1220, %v1219, %v1217
        %s1223 = scalar_lea.vmem %s3, 32
        %v1224 = vld [vmem:[%s1223] sm:$0xf]
        %s1225 = scalar_lea.vmem %s7, 16
        %v1226 = vld [vmem:[%s1225] sm:$0x3]
        %v1228 = vlaneseq
        %v1229 = vshrl.u32 %v1228, 7
        %v1230 = vsub.s32 0, %v1229
        %v1231 = vrot.slane %v1226, %v1230
        %v1232 = vlaneseq
        %v1233 = vshrl.u32 %v1232, 7
        %v1234 = vsub.s32 1, %v1233
        %v1235 = vrot.slane %v1226, %v1234
        %v1238 = vmul.f32 %v1221, %v1231
        %v1239 = vmul.f32 %v1222, %v1235
        %v1241 = vsel %vm418, %v1224, 0
        %v1244 = vsel %vm422, %v1238, 0
        %v1247 = vsel %vm422, %v1239, 0
        %1249 = vmatprep.subr.mxu0 %v1247
        %1250 = vmatpush1.msra.mxu0 %v1244
        %1251 = vmatprep.subr.mxu0 0.0
        %1252 = vmatpush1.msra.mxu0 0.0
        %1253 = vmatprep.subr.mxu0 0.0
        %1254 = vmatpush1.msra.mxu0 0.0
        %1255 = vmatprep.subr.mxu0 0.0
        %1256 = vmatpush1.msra.mxu0 0.0
        %1257 = vmatprep.subr.mxu0 0.0
        %1258 = vmatpush1.msra.mxu0 0.0
        %1259 = vmatprep.subr.mxu0 0.0
        %1260 = vmatpush1.msra.mxu0 0.0
        %1261 = vmatprep.subr.mxu0 0.0
        %1262 = vmatpush1.msra.mxu0 0.0
        %1263 = vmatprep.subr.mxu0 0.0
        %1264 = vmatpush1.msra.mxu0 0.0
        %1265 = vmatprep.subr.mxu0 0.0
        %1266 = vmatpush1.msra.mxu0 0.0
        %1267 = vmatprep.subr.mxu0 0.0
        %1268 = vmatpush1.msra.mxu0 0.0
        %1269 = vmatprep.subr.mxu0 0.0
        %1270 = vmatpush1.msra.mxu0 0.0
        %1271 = vmatprep.subr.mxu0 0.0
        %1272 = vmatpush1.msra.mxu0 0.0
        %1273 = vmatprep.subr.mxu0 0.0
        %1274 = vmatpush1.msra.mxu0 0.0
        %1275 = vmatprep.subr.mxu0 0.0
        %1276 = vmatpush1.msra.mxu0 0.0
        %1277 = vmatprep.subr.mxu0 0.0
        %1278 = vmatpush1.msra.mxu0 0.0
        %1279 = vmatprep.subr.mxu0 0.0
        %1280 = vmatpush1.msra.mxu0 0.0
        %1281 = vmatprep.subr.mxu0 0.0
        %1282 = vmatpush1.msra.mxu0 0.0
        %1283 = vmatprep.subr.mxu0 0.0
        %1284 = vmatpush1.msra.mxu0 0.0
        %1285 = vmatprep.subr.mxu0 0.0
        %1286 = vmatpush1.msra.mxu0 0.0
        %1287 = vmatprep.subr.mxu0 0.0
        %1288 = vmatpush1.msra.mxu0 0.0
        %1289 = vmatprep.subr.mxu0 0.0
        %1290 = vmatpush1.msra.mxu0 0.0
        %1291 = vmatprep.subr.mxu0 0.0
        %1292 = vmatpush1.msra.mxu0 0.0
        %1293 = vmatprep.subr.mxu0 0.0
        %1294 = vmatpush1.msra.mxu0 0.0
        %1295 = vmatprep.subr.mxu0 0.0
        %1296 = vmatpush1.msra.mxu0 0.0
        %1297 = vmatprep.subr.mxu0 0.0
        %1298 = vmatpush1.msra.mxu0 0.0
        %1299 = vmatprep.subr.mxu0 0.0
        %1300 = vmatpush1.msra.mxu0 0.0
        %1301 = vmatprep.subr.mxu0 0.0
        %1302 = vmatpush1.msra.mxu0 0.0
        %1303 = vmatprep.subr.mxu0 0.0
        %1304 = vmatpush1.msra.mxu0 0.0
        %1305 = vmatprep.subr.mxu0 0.0
        %1306 = vmatpush1.msra.mxu0 0.0
        %1307 = vmatprep.subr.mxu0 0.0
        %1308 = vmatpush1.msra.mxu0 0.0
        %1309 = vmatprep.subr.mxu0 0.0
        %1310 = vmatpush1.msra.mxu0 0.0
        %1311 = vmatprep.subr.mxu0 0.0
        %1312 = vmatpush1.msra.mxu0 0.0
        %1313 = vmatprep.mubr.f32.mxu0 0.0
        %1314 = vmatmul.mubr.f32.gmra.mrb[0].mxu0 %v1241
        %v1315 = vpop.f32.mrb[0].mxu0
        %v1316 = vadd.f32 0.0, %v1315
        %v1317 = vpop.f32.mrb[0].mxu0
        %v1318 = vadd.f32 0.0, %v1317
        %1319 = vdwg.mxu0
        %v1320 = vadd.f32 %v1214, %v1316
        %v1321 = vadd.f32 %v1215, %v1318
        %v1322 = vld [vmem:[%s4] sm:$0xf]
        %1324 = vset.pattern.permute.xlu0 0
        %1325 = vperm.xlu0 %1324, %v1322
        %v1326 = vpop.permute.xlu0 %1325
        %v1328 = vadd.f32 %v1320, %v1326
        %v1329 = vadd.f32 %v1321, %v1326
        %v1330 = vmax.f32 %v1328, 0.0
        %v1331 = vmax.f32 %v1329, 0.0
        %v1332 = vld [vmem:[%s5] sm:$0xff]
        %v1333 = vld [vmem:[%s5 + $0x8] sm:$0xff]
        %v1334 = vld [vmem:[%s6] sm:$0xff]
        %v1335 = vld [vmem:[%s6 + $0x8] sm:$0xff]
        %1337 = vset.pattern.permute.xlu0 0
        %1338 = vperm.xlu0 %1337, %v1334
        %v1339 = vpop.permute.xlu0 %1338
        %1342 = vset.pattern.permute.xlu0 0
        %1343 = vperm.xlu0 %1342, %v1335
        %v1344 = vpop.permute.xlu0 %1343
        %v1347 = vsel %vm418, %v1332, 0
        %v1350 = vsel %vm418, %v1333, 0
        %v1353 = vsel %vm422, %v1330, 0
        %v1356 = vsel %vm422, %v1331, 0
        %1358 = vmatprep.subr.mxu0 %v1356
        %1359 = vmatpush1.msra.mxu0 %v1353
        %1360 = vmatprep.subr.mxu0 0.0
        %1361 = vmatpush1.msra.mxu0 0.0
        %1362 = vmatprep.subr.mxu0 0.0
        %1363 = vmatpush1.msra.mxu0 0.0
        %1364 = vmatprep.subr.mxu0 0.0
        %1365 = vmatpush1.msra.mxu0 0.0
        %1366 = vmatprep.subr.mxu0 0.0
        %1367 = vmatpush1.msra.mxu0 0.0
        %1368 = vmatprep.subr.mxu0 0.0
        %1369 = vmatpush1.msra.mxu0 0.0
        %1370 = vmatprep.subr.mxu0 0.0
        %1371 = vmatpush1.msra.mxu0 0.0
        %1372 = vmatprep.subr.mxu0 0.0
        %1373 = vmatpush1.msra.mxu0 0.0
        %1374 = vmatprep.subr.mxu0 0.0
        %1375 = vmatpush1.msra.mxu0 0.0
        %1376 = vmatprep.subr.mxu0 0.0
        %1377 = vmatpush1.msra.mxu0 0.0
        %1378 = vmatprep.subr.mxu0 0.0
        %1379 = vmatpush1.msra.mxu0 0.0
        %1380 = vmatprep.subr.mxu0 0.0
        %1381 = vmatpush1.msra.mxu0 0.0
        %1382 = vmatprep.subr.mxu0 0.0
        %1383 = vmatpush1.msra.mxu0 0.0
        %1384 = vmatprep.subr.mxu0 0.0
        %1385 = vmatpush1.msra.mxu0 0.0
        %1386 = vmatprep.subr.mxu0 0.0
        %1387 = vmatpush1.msra.mxu0 0.0
        %1388 = vmatprep.subr.mxu0 0.0
        %1389 = vmatpush1.msra.mxu0 0.0
        %1390 = vmatprep.subr.mxu0 0.0
        %1391 = vmatpush1.msra.mxu0 0.0
        %1392 = vmatprep.subr.mxu0 0.0
        %1393 = vmatpush1.msra.mxu0 0.0
        %1394 = vmatprep.subr.mxu0 0.0
        %1395 = vmatpush1.msra.mxu0 0.0
        %1396 = vmatprep.subr.mxu0 0.0
        %1397 = vmatpush1.msra.mxu0 0.0
        %1398 = vmatprep.subr.mxu0 0.0
        %1399 = vmatpush1.msra.mxu0 0.0
        %1400 = vmatprep.subr.mxu0 0.0
        %1401 = vmatpush1.msra.mxu0 0.0
        %1402 = vmatprep.subr.mxu0 0.0
        %1403 = vmatpush1.msra.mxu0 0.0
        %1404 = vmatprep.subr.mxu0 0.0
        %1405 = vmatpush1.msra.mxu0 0.0
        %1406 = vmatprep.subr.mxu0 0.0
        %1407 = vmatpush1.msra.mxu0 0.0
        %1408 = vmatprep.subr.mxu0 0.0
        %1409 = vmatpush1.msra.mxu0 0.0
        %1410 = vmatprep.subr.mxu0 0.0
        %1411 = vmatpush1.msra.mxu0 0.0
        %1412 = vmatprep.subr.mxu0 0.0
        %1413 = vmatpush1.msra.mxu0 0.0
        %1414 = vmatprep.subr.mxu0 0.0
        %1415 = vmatpush1.msra.mxu0 0.0
        %1416 = vmatprep.subr.mxu0 0.0
        %1417 = vmatpush1.msra.mxu0 0.0
        %1418 = vmatprep.subr.mxu0 0.0
        %1419 = vmatpush1.msra.mxu0 0.0
        %1420 = vmatprep.subr.mxu0 0.0
        %1421 = vmatpush1.msra.mxu0 0.0
        %1422 = vmatprep.mubr.f32.mxu0 0.0
        %1423 = vmatmul.mubr.f32.gmra.mrb[0].mxu0 %v1347
        %v1424 = vpop.f32.mrb[0].mxu0
        %v1425 = vadd.f32 %v1339, %v1424
        %v1426 = vpop.f32.mrb[0].mxu0
        %v1427 = vadd.f32 %v1339, %v1426
        %1428 = vmatprep.mubr.f32.mxu0 0.0
        %1429 = vmatmul.mubr.f32.gmra.mrb[0].mxu0 %v1350
        %v1430 = vpop.f32.mrb[0].mxu0
        %v1431 = vadd.f32 %v1344, %v1430
        %v1432 = vpop.f32.mrb[0].mxu0
        %v1433 = vadd.f32 %v1344, %v1432
        %1434 = vdwg.mxu0
        %v1435 = vadd.f32 %v1425, %v304
        %v1436 = vadd.f32 %v1427, %v305
        %v1437 = vadd.f32 %v1431, %v306
        %v1438 = vadd.f32 %v1433, %v307
        %v1439 = vmax.f32 %v1435, 0.0
        %v1440 = vmax.f32 %v1436, 0.0
        %v1441 = vmax.f32 %v1437, 0.0
        %v1442 = vmax.f32 %v1438, 0.0
        %1443 = vst [vmem:[%s298] sm:$0xff] %v1439
        %1444 = vst [vmem:[%s298 + $0x8] sm:$0xff] %v1440
        %1445 = vst [vmem:[%s298 + $0x10] sm:$0xff] %v1441
        %1446 = vst [vmem:[%s298 + $0x18] sm:$0xff] %v1442
        %s1447 = sand.u32 %s203, 1
        %s1448 = scalar_lea.sflag [#allocation3], %s1447
        %s1449 = sand.u32 %s203, 1
        %s1450 = smul.addr %s1449, 32
        %s1451 = scalar_lea.vmem [#allocation2], %s1450
        // Predicated region
        $region53: #{tpu_custom_call.1} parent=51 // pred_check
          %p1452 = pneg %p213
        $region54: #{tpu_custom_call.1} parent=51 // pred_check_branch
          %1454 = sbr.rel (%p1452) target = $region56
        $region55: #{tpu_custom_call.1} parent=51 // pred_region
          %s1456 = ssub.s32 512, 512
          %1457 = vsyncadd %s1448, %s1456
          %s1458 = smul.addr %s22, 4
          %s1459 = smul.addr %s1458, 128
          %s1460 = scalar_lea.hbm %s8, %s1459
          %s1461 = sshll.u32 %s1451, 4
          %s1462 = int_to_ptr.vmem [resolvable:$true] %s1461
          %1467 = dma.vmem_to_hbm [thread:$0]  %s1462, 512, %s1460, %s1448, 256, 256, 16
        $region56: #{tpu_custom_call.1} parent=51 // pred_fallthru
          _
      $region52: #{tpu_custom_call.1} parent=5 // pred_fallthru
        _
      %p1468 = scmp.le.s32.totalorder 2, %s17
      // Predicated region
      $region57: #{tpu_custom_call.1} parent=5 // pred_check
        %p1469 = pneg %p1468
      $region58: #{tpu_custom_call.1} parent=5 // pred_check_branch
        %1471 = sbr.rel (%p1469) target = $region60
      $region59: #{tpu_custom_call.1} parent=5 // pred_region
        %s1472 = ssub.s32 %s17, 2
        // Predicated region
        $region61: #{tpu_custom_call.1} parent=59 // pred_check
          %p1473 = pneg %p219
        $region62: #{tpu_custom_call.1} parent=59 // pred_check_branch
          %1475 = sbr.rel (%p1473) target = $region64
        $region63: #{tpu_custom_call.1} parent=59 // pred_region
          %s1476 = sand.u32 %s204, 1
          %s1477 = scalar_lea.sflag [#allocation3], %s1476
          %s1478 = sand.u32 %s204, 1
          %s1479 = smul.addr %s1478, 32
          %s1480 = scalar_lea.vmem [#allocation2], %s1479
          %1481 = dma.done %s1477, 512
        $region64: #{tpu_custom_call.1} parent=59 // pred_fallthru
          _
      $region60: #{tpu_custom_call.1} parent=5 // pred_fallthru
        _
    $region6: #{tpu_custom_call.1} parent=1 // loop_footer
      %s21 = sadd.s32 1, %s17
    $region7: #{tpu_custom_call.1} parent=1 // loop_footer_branch
      %16 = sbr.rel target = $region3
    $region8: #{tpu_custom_call.1} parent=1 // loop_exit
      _
    %1482 = vsyncpa [#allocation3], 1
    %s1483 = scalar_lea.sflag [#allocation3], 1
    %1484 = vsyncpa %s1483, 1

</llo_original>
